<compile_context>
chip_gen: v5e
topology: v5e:2x2
jax: 0.10.0
libtpu: 0.0.40
codegen_flags: <defaults>
</compile_context>

<pallas_src>
import functools
import math

import numpy as np
import jax
import jax.numpy as jnp
from jax import lax
from jax.experimental import pallas as pl
from jax.experimental.pallas import tpu as pltpu


def create_positional_encoding(max_len, d_model):
    """Exact re-implementation of Embeddings.create_positinal_encoding
    (note the non-standard 2*i / 2*(i+1) exponents of the original code)."""
    assert d_model % 2 == 0, "d_model must be even (original code writes pe[:, i+1])"
    pos = np.arange(max_len, dtype=np.float64)[:, None]          # (L, 1)
    i = np.arange(0, d_model, 2, dtype=np.float64)[None, :]      # (1, D/2) even col idx
    pe = np.zeros((max_len, d_model), dtype=np.float64)
    pe[:, 0::2] = np.sin(pos / 10000.0 ** (2.0 * i / d_model))
    pe[:, 1::2] = np.cos(pos / 10000.0 ** (2.0 * (i + 1.0) / d_model))
    return jnp.asarray(pe, dtype=jnp.float32)                    # (max_len, d_model)


# --------------------------------------------------------------------------- #
# VMEM-budget helpers (per-generation: v7x has only 64 MiB physical VMEM/TC)
# --------------------------------------------------------------------------- #
@functools.lru_cache(maxsize=None)
def _vmem_capacity_bytes():
    cap = 64 << 20  # conservative default == v7x physical VMEM per TensorCore
    try:
        info = pltpu.get_tpu_info()
        c = getattr(info, "vmem_capacity_bytes", None)
        if c:
            cap = int(c)
    except Exception:
        pass
    return cap


def _tile_budget_bytes():
    # ~40% of VMEM for the live pipelined tiles, capped for v5e/v6e (128 MiB).
    return min((_vmem_capacity_bytes() * 2) // 5, 48 << 20)


def _vmem_limit_bytes():
    return int(min((_vmem_capacity_bytes() * 3) // 4, 96 << 20))


def _cdiv(a, b):
    return -(-a // b)


def _round_up(a, m):
    return _cdiv(a, m) * m


def _pick_seq_tile(seq_len, d_model, n_live_tiles, max_tile=512):
    """Largest multiple-of-8 row tile keeping ~n_live_tiles live f32 copies of a
    (tile, d_model) buffer inside the VMEM budget.  Any seq length is handled by
    cdiv + padding in the wrapper (no full-sequence fallback)."""
    cap = _tile_budget_bytes() // max(1, n_live_tiles * d_model * 4)
    cap = max(8, (cap // 8) * 8)
    cap = min(cap, max_tile)
    return min(_round_up(seq_len, 8), cap)


def _pick_batch_tile(batch, tile_s, d_model):
    """Fold batch rows into each layer-N block so a grid step moves >=512 rows
    (the add path is purely HBM-bound; tiny steps are per-step-overhead bound)."""
    bt = max(1, min(batch, 512 // max(1, tile_s)))
    while batch % bt != 0:
        bt -= 1
    # live tiles ~ 2*x + 2*pe + 2*out  ->  (4*bt + 2) copies of (tile_s, D) f32
    while bt > 1 and (4 * bt + 2) * tile_s * d_model * 4 > _tile_budget_bytes():
        bt -= 1
        while batch % bt != 0:
            bt -= 1
    return bt


# --------------------------------------------------------------------------- #
# layer 0 : deep-pipelined DMA row-gather from the HBM table + fused pe/te add
# --------------------------------------------------------------------------- #
def _embed_gather_kernel(ids_ref, tbl_hbm, pe_ref, out_ref, gbuf, sems,
                         *, tile_s, seq_pad, vocab, nsem, chunk):
    # ids_ref : (B*seq_pad,) int32  SMEM (scalar prefetch, flattened -> tight padding)
    # tbl_hbm : (V, D)       f32    HBM  (table * sqrt(d_model))
    # pe_ref  : (tile_s, D)  f32    VMEM (pe + te[layer], seq-indexed block)
    # out_ref : (tile_s, D)  f32    VMEM (batch dim squeezed)
    # gbuf    : (tile_s, D)  f32    VMEM scratch (gather destinations)
    # sems    : (nsem,)      DMA semaphores (nsem outstanding row copies)
    b = pl.program_id(0)
    s0 = pl.program_id(1) * tile_s
    base = b * seq_pad + s0

    def read_id(r):
        # Clamp (possibly speculative, hoisted) reads to the current tile so they
        # never index SMEM out of bounds; clamp the token id itself so OOB ids
        # gather a valid row (PyTorch would raise; documented divergence).
        idx = jnp.minimum(base + r, base + (tile_s - 1))
        tok = ids_ref[idx]
        return jnp.minimum(jnp.maximum(tok, 0), vocab - 1)

    def start_row(r, tok):
        pltpu.make_async_copy(tbl_hbm.at[pl.ds(tok, 1)],
                              gbuf.at[pl.ds(r, 1)],
                              sems.at[r & (nsem - 1)]).start()

    def wait_row(r):
        # Dummy descriptor built from the SAME src/dst refs, shapes and dtype as
        # start_row, so the awaited byte count always matches the real copy.
        pltpu.make_async_copy(tbl_hbm.at[pl.ds(0, 1)],
                              gbuf.at[pl.ds(r, 1)],
                              sems.at[r & (nsem - 1)]).wait()

    # ---- prime: fill the pipeline with up to `nsem` outstanding row gathers ----
    nprime = min(nsem, tile_s)
    for r in range(nprime):                       # fully unrolled (static)
        start_row(r, read_id(r))

    n_chunks = tile_s // chunk
    refill_ahead = nsem // chunk                  # chunks between a wait and its refill

    # ---- steady state, per 8-row chunk: pre-read ids, wait, refill, add+store --
    def chunk_body(g, carry):
        r0 = pl.multiple_of(g * chunk, chunk)
        gr = g + refill_ahead
        rr0 = gr * chunk
        # (1) hoist SMEM id reads above the waits (.wait() breaks sst->sld fwd)
        next_toks = [read_id(rr0 + j) for j in range(chunk)]
        # (2) wait for this chunk's gathers
        for j in range(chunk):
            wait_row(r0 + j)
        # (3) immediately refill the freed semaphore slots with the next chunk
        @pl.when(gr < n_chunks)
        def _():
            for j in range(chunk):
                start_row(rr0 + j, next_toks[j])
        # (4) fused pe/te add + full-sublane store; overlaps with in-flight DMAs
        out_ref[pl.ds(r0, chunk), :] = (gbuf[pl.ds(r0, chunk), :]
                                        + pe_ref[pl.ds(r0, chunk), :])
        return carry

    lax.fori_loop(0, n_chunks, chunk_body, 0,
                  unroll=max(1, min(2, n_chunks)))


# --------------------------------------------------------------------------- #
# layer N : pure element-wise add (HBM-bound), batch rows folded into the block
# --------------------------------------------------------------------------- #
def _add_pe_kernel(x_ref, pe_ref, out_ref):
    # (Bt, tile_s, D) + (tile_s, D) broadcast over the folded batch rows.
    out_ref[...] = x_ref[...] + pe_ref[...][None, :, :]


class EmbeddingsPallas:
    """Pallas/JAX port of the PyTorch Embeddings module (eval mode)."""

    def __init__(self, vocab_size, d_model, max_len=50, num_layers=6, key=None):
        assert d_model % 2 == 0
        self.vocab_size = vocab_size
        self.d_model = d_model
        self.max_len = max_len
        self.num_layers = num_layers
        key = key if key is not None else jax.random.PRNGKey(0)
        # nn.Embedding default init: N(0, 1)
        self.embed_w = jax.random.normal(key, (vocab_size, d_model), dtype=jnp.float32)
        # Fold sqrt(d_model) into the table once (removes a per-element mul).
        self.embed_w_scaled = self.embed_w * math.sqrt(d_model)
        self.pe = create_positional_encoding(max_len, d_model)      # (max_len, D)
        self.te = create_positional_encoding(num_layers, d_model)   # (num_layers, D)

    def __call__(self, embedding, layer_idx):
        layer_idx = int(layer_idx)
        assert 0 <= layer_idx < self.num_layers
        D = self.d_model
        vmem_limit = _vmem_limit_bytes()

        if layer_idx == 0:
            ids = embedding.astype(jnp.int32)            # (B, S) token ids
            B, S = ids.shape
        else:
            x = embedding.astype(jnp.float32)            # (B, S, D)
            B, S, _ = x.shape
        assert S <= self.max_len, "sequence longer than the positional-encoding table"

        # Fold te[layer] into pe once (tiny (S, D) op) -> one VPU add in-kernel.
        pe_te = self.pe[:S] + self.te[layer_idx][None, :]            # (S, D)

        if layer_idx == 0:
            # live VMEM tiles ~ gbuf + 2x pe + 2x out = 5
            tile_s = _pick_seq_tile(S, D, n_live_tiles=5)
            # v7x has 2 TensorCores: guarantee >= 2 "parallel" grid steps.
            if B * _cdiv(S, tile_s) < 2 and tile_s >= 16:
                tile_s = max(8, ((tile_s // 2) // 8) * 8)
            n_s = _cdiv(S, tile_s)
            S_pad = n_s * tile_s
            if S_pad != S:
                ids = jnp.pad(ids, ((0, 0), (0, S_pad - S)))          # pad with id 0
                pe_te = jnp.pad(pe_te, ((0, S_pad - S), (0, 0)))
            ids_flat = ids.reshape(-1)          # 1-D ids -> tight SMEM padding

            nsem, chunk = 32, 8                 # 32 outstanding row DMAs, 8-row chunks
            kernel = functools.partial(
                _embed_gather_kernel, tile_s=tile_s, seq_pad=S_pad,
                vocab=self.vocab_size, nsem=nsem, chunk=chunk)
            out = pl.pallas_call(
                kernel,
                out_shape=jax.ShapeDtypeStruct((B, S_pad, D), jnp.float32),
                grid_spec=pltpu.PrefetchScalarGridSpec(
                    num_scalar_prefetch=1,                            # ids -> SMEM
                    grid=(B, n_s),
                    in_specs=[
                        pl.BlockSpec(memory_space=pl.ANY),            # table stays in HBM
                        pl.BlockSpec((tile_s, D), lambda b, s, _ids: (s, 0)),
                    ],
                    out_specs=pl.BlockSpec((None, tile_s, D),
                                           lambda b, s, _ids: (b, s, 0)),
                    scratch_shapes=[
                        pltpu.VMEM((tile_s, D), jnp.float32),
                        pltpu.SemaphoreType.DMA((nsem,)),
                    ],
                ),
                compiler_params=pltpu.CompilerParams(
                    dimension_semantics=("parallel", "parallel"),
                    vmem_limit_bytes=vmem_limit),
            )(ids_flat, self.embed_w_scaled, pe_te)
        else:
            tile_s = _pick_seq_tile(S, D, n_live_tiles=6)
            n_s = _cdiv(S, tile_s)
            S_pad = n_s * tile_s
            bt = _pick_batch_tile(B, tile_s, D)
            # v7x: make sure both TensorCores get at least one grid step.
            if (B // bt) * n_s < 2:
                if bt > 1:
                    bt -= 1
                    while B % bt != 0:
                        bt -= 1
                elif tile_s >= 16:
                    tile_s = max(8, ((tile_s // 2) // 8) * 8)
                    n_s = _cdiv(S, tile_s)
                    S_pad = n_s * tile_s
            if S_pad != S:
                x = jnp.pad(x, ((0, 0), (0, S_pad - S), (0, 0)))
                pe_te = jnp.pad(pe_te, ((0, S_pad - S), (0, 0)))
            out = pl.pallas_call(
                _add_pe_kernel,
                out_shape=jax.ShapeDtypeStruct((B, S_pad, D), jnp.float32),
                grid=(B // bt, n_s),
                in_specs=[
                    pl.BlockSpec((bt, tile_s, D), lambda b, s: (b, s, 0)),    # x
                    pl.BlockSpec((tile_s, D), lambda b, s: (s, 0)),           # pe+te
                ],
                out_specs=pl.BlockSpec((bt, tile_s, D), lambda b, s: (b, s, 0)),
                compiler_params=pltpu.CompilerParams(
                    dimension_semantics=("parallel", "parallel"),
                    vmem_limit_bytes=vmem_limit),
            )(x, pe_te)

        if S_pad != S:
            out = out[:, :S, :]
        # TODO(synk): nn.Dropout(0.1) omitted — identity in eval/inference mode.
        return out


def _reference(model, embedding, layer_idx):
    """Pure-JAX reference of the PyTorch forward (eval mode)."""
    if layer_idx == 0:
        x = model.embed_w[embedding] * math.sqrt(model.d_model)
    else:
        x = embedding.astype(jnp.float32)
    x = x + model.pe[None, : x.shape[1], :]
    x = x + model.te[layer_idx][None, None, :]
    return x


if __name__ == "__main__":
    key = jax.random.PRNGKey(0)
    k_w, k_ids, k_x, k_ids2, k_x2 = jax.random.split(key, 5)

    B, S, D, V = 2, 8, 128, 64
    model = EmbeddingsPallas(vocab_size=V, d_model=D, max_len=16, num_layers=6, key=k_w)

    # layer_idx == 0 path: token ids -> DMA row-gather * sqrt(D) + pe + te[0]
    ids = jax.random.randint(k_ids, (B, S), 0, V, dtype=jnp.int32)
    out0 = jax.block_until_ready(model(ids, layer_idx=0))
    ref0 = _reference(model, ids, 0)
    np.testing.assert_allclose(np.asarray(out0), np.asarray(ref0), rtol=1e-5, atol=1e-5)

    # layer_idx != 0 path: already-embedded activations + pe + te[layer_idx]
    x = jax.random.normal(k_x, (B, S, D), dtype=jnp.float32)
    out2 = jax.block_until_ready(model(x, layer_idx=2))
    ref2 = _reference(model, x, 2)
    np.testing.assert_allclose(np.asarray(out2), np.asarray(ref2), rtol=1e-5, atol=1e-5)

    # Non-multiple-of-8 sequence length exercises the cdiv + padding path.
    S_odd = 12
    ids_o = jax.random.randint(k_ids2, (B, S_odd), 0, V, dtype=jnp.int32)
    out0o = jax.block_until_ready(model(ids_o, layer_idx=0))
    ref0o = _reference(model, ids_o, 0)
    np.testing.assert_allclose(np.asarray(out0o), np.asarray(ref0o), rtol=1e-5, atol=1e-5)

    x_o = jax.random.normal(k_x2, (B, S_odd, D), dtype=jnp.float32)
    out3o = jax.block_until_ready(model(x_o, layer_idx=3))
    ref3o = _reference(model, x_o, 3)
    np.testing.assert_allclose(np.asarray(out3o), np.asarray(ref3o), rtol=1e-5, atol=1e-5)

    print("KERNEL_OK")
</pallas_src>

<mosaic_0001>
module attributes {stable_mosaic.version = 11 : i64} {
  func.func @_embed_gather_kernel(%arg0: i32, %arg1: i32, %arg2: memref<16xi32, #tpu.memory_space<smem>>, %arg3: memref<64x128xf32, #tpu.memory_space<any>>, %arg4: memref<8x128xf32, #tpu.memory_space<vmem>>, %arg5: memref<1x8x128xf32, #tpu.memory_space<vmem>>, %arg6: memref<8x128xf32, #tpu.memory_space<vmem>>, %arg7: memref<32x!tpu.dma_semaphore, #tpu.memory_space<semaphore_mem>>) attributes {dimension_semantics = [#tpu.dimension_semantics<parallel>, #tpu.dimension_semantics<parallel>], iteration_bounds = array<i64: 2, 1>, scalar_prefetch = 1 : i64, scratch_operands = 2 : i64, tpu.core_type = #tpu.core_type<tc>, window_params = [{}, {transform_indices = @transform_1, window_bounds = array<i64: 8, 128>}, {transform_indices = @transform_2, window_bounds = array<i64: 1, 8, 128>}]} {
    %c8_i32 = arith.constant 8 : i32
    %0 = arith.muli %arg1, %c8_i32 : i32
    %c8_i32_0 = arith.constant 8 : i32
    %1 = arith.muli %arg0, %c8_i32_0 : i32
    %2 = arith.addi %1, %0 : i32
    %c0_i32 = arith.constant 0 : i32
    %3 = arith.addi %2, %c0_i32 : i32
    %c7_i32 = arith.constant 7 : i32
    %4 = arith.addi %2, %c7_i32 : i32
    %5 = arith.minsi %3, %4 : i32
    %6 = arith.index_cast %5 : i32 to index
    %7 = memref.load %arg2[%6] : memref<16xi32, #tpu.memory_space<smem>>
    %c0_i32_1 = arith.constant 0 : i32
    %8 = arith.maxsi %7, %c0_i32_1 : i32
    %c63_i32 = arith.constant 63 : i32
    %9 = arith.minsi %8, %c63_i32 : i32
    %c0_i32_2 = arith.constant 0 : i32
    %c0_i32_3 = arith.constant 0 : i32
    %10 = tpu.memref_slice %arg3[%9, %c0_i32_3] : memref<64x128xf32, #tpu.memory_space<any>> -> memref<1x128xf32, #tpu.memory_space<any>>
    %c0_i32_4 = arith.constant 0 : i32
    %c0_i32_5 = arith.constant 0 : i32
    %11 = tpu.memref_slice %arg6[%c0_i32_4, %c0_i32_5] : memref<8x128xf32, #tpu.memory_space<vmem>> -> memref<1x128xf32, #tpu.memory_space<vmem>>
    %12 = tpu.memref_slice %arg7[%c0_i32_2] : memref<32x!tpu.dma_semaphore, #tpu.memory_space<semaphore_mem>> -> memref<1x!tpu.dma_semaphore, #tpu.memory_space<semaphore_mem>>
    %13 = tpu.memref_squeeze %12 : memref<1x!tpu.dma_semaphore, #tpu.memory_space<semaphore_mem>> -> memref<!tpu.dma_semaphore, #tpu.memory_space<semaphore_mem>>
    tpu.enqueue_dma source(%10 : memref<1x128xf32, #tpu.memory_space<any>>) target(%11 : memref<1x128xf32, #tpu.memory_space<vmem>>) target_semaphore(%13 : memref<!tpu.dma_semaphore, #tpu.memory_space<semaphore_mem>>)
    %c1_i32 = arith.constant 1 : i32
    %14 = arith.addi %2, %c1_i32 : i32
    %c7_i32_6 = arith.constant 7 : i32
    %15 = arith.addi %2, %c7_i32_6 : i32
    %16 = arith.minsi %14, %15 : i32
    %17 = arith.index_cast %16 : i32 to index
    %18 = memref.load %arg2[%17] : memref<16xi32, #tpu.memory_space<smem>>
    %c0_i32_7 = arith.constant 0 : i32
    %19 = arith.maxsi %18, %c0_i32_7 : i32
    %c63_i32_8 = arith.constant 63 : i32
    %20 = arith.minsi %19, %c63_i32_8 : i32
    %c1_i32_9 = arith.constant 1 : i32
    %c0_i32_10 = arith.constant 0 : i32
    %21 = tpu.memref_slice %arg3[%20, %c0_i32_10] : memref<64x128xf32, #tpu.memory_space<any>> -> memref<1x128xf32, #tpu.memory_space<any>>
    %c1_i32_11 = arith.constant 1 : i32
    %c0_i32_12 = arith.constant 0 : i32
    %22 = tpu.memref_slice %arg6[%c1_i32_11, %c0_i32_12] : memref<8x128xf32, #tpu.memory_space<vmem>> -> memref<1x128xf32, #tpu.memory_space<vmem>>
    %23 = tpu.memref_slice %arg7[%c1_i32_9] : memref<32x!tpu.dma_semaphore, #tpu.memory_space<semaphore_mem>> -> memref<1x!tpu.dma_semaphore, #tpu.memory_space<semaphore_mem>>
    %24 = tpu.memref_squeeze %23 : memref<1x!tpu.dma_semaphore, #tpu.memory_space<semaphore_mem>> -> memref<!tpu.dma_semaphore, #tpu.memory_space<semaphore_mem>>
    tpu.enqueue_dma source(%21 : memref<1x128xf32, #tpu.memory_space<any>>) target(%22 : memref<1x128xf32, #tpu.memory_space<vmem>>) target_semaphore(%24 : memref<!tpu.dma_semaphore, #tpu.memory_space<semaphore_mem>>)
    %c2_i32 = arith.constant 2 : i32
    %25 = arith.addi %2, %c2_i32 : i32
    %c7_i32_13 = arith.constant 7 : i32
    %26 = arith.addi %2, %c7_i32_13 : i32
    %27 = arith.minsi %25, %26 : i32
    %28 = arith.index_cast %27 : i32 to index
    %29 = memref.load %arg2[%28] : memref<16xi32, #tpu.memory_space<smem>>
    %c0_i32_14 = arith.constant 0 : i32
    %30 = arith.maxsi %29, %c0_i32_14 : i32
    %c63_i32_15 = arith.constant 63 : i32
    %31 = arith.minsi %30, %c63_i32_15 : i32
    %c2_i32_16 = arith.constant 2 : i32
    %c0_i32_17 = arith.constant 0 : i32
    %32 = tpu.memref_slice %arg3[%31, %c0_i32_17] : memref<64x128xf32, #tpu.memory_space<any>> -> memref<1x128xf32, #tpu.memory_space<any>>
    %c2_i32_18 = arith.constant 2 : i32
    %c0_i32_19 = arith.constant 0 : i32
    %33 = tpu.memref_slice %arg6[%c2_i32_18, %c0_i32_19] : memref<8x128xf32, #tpu.memory_space<vmem>> -> memref<1x128xf32, #tpu.memory_space<vmem>>
    %34 = tpu.memref_slice %arg7[%c2_i32_16] : memref<32x!tpu.dma_semaphore, #tpu.memory_space<semaphore_mem>> -> memref<1x!tpu.dma_semaphore, #tpu.memory_space<semaphore_mem>>
    %35 = tpu.memref_squeeze %34 : memref<1x!tpu.dma_semaphore, #tpu.memory_space<semaphore_mem>> -> memref<!tpu.dma_semaphore, #tpu.memory_space<semaphore_mem>>
    tpu.enqueue_dma source(%32 : memref<1x128xf32, #tpu.memory_space<any>>) target(%33 : memref<1x128xf32, #tpu.memory_space<vmem>>) target_semaphore(%35 : memref<!tpu.dma_semaphore, #tpu.memory_space<semaphore_mem>>)
    %c3_i32 = arith.constant 3 : i32
    %36 = arith.addi %2, %c3_i32 : i32
    %c7_i32_20 = arith.constant 7 : i32
    %37 = arith.addi %2, %c7_i32_20 : i32
    %38 = arith.minsi %36, %37 : i32
    %39 = arith.index_cast %38 : i32 to index
    %40 = memref.load %arg2[%39] : memref<16xi32, #tpu.memory_space<smem>>
    %c0_i32_21 = arith.constant 0 : i32
    %41 = arith.maxsi %40, %c0_i32_21 : i32
    %c63_i32_22 = arith.constant 63 : i32
    %42 = arith.minsi %41, %c63_i32_22 : i32
    %c3_i32_23 = arith.constant 3 : i32
    %c0_i32_24 = arith.constant 0 : i32
    %43 = tpu.memref_slice %arg3[%42, %c0_i32_24] : memref<64x128xf32, #tpu.memory_space<any>> -> memref<1x128xf32, #tpu.memory_space<any>>
    %c3_i32_25 = arith.constant 3 : i32
    %c0_i32_26 = arith.constant 0 : i32
    %44 = tpu.memref_slice %arg6[%c3_i32_25, %c0_i32_26] : memref<8x128xf32, #tpu.memory_space<vmem>> -> memref<1x128xf32, #tpu.memory_space<vmem>>
    %45 = tpu.memref_slice %arg7[%c3_i32_23] : memref<32x!tpu.dma_semaphore, #tpu.memory_space<semaphore_mem>> -> memref<1x!tpu.dma_semaphore, #tpu.memory_space<semaphore_mem>>
    %46 = tpu.memref_squeeze %45 : memref<1x!tpu.dma_semaphore, #tpu.memory_space<semaphore_mem>> -> memref<!tpu.dma_semaphore, #tpu.memory_space<semaphore_mem>>
    tpu.enqueue_dma source(%43 : memref<1x128xf32, #tpu.memory_space<any>>) target(%44 : memref<1x128xf32, #tpu.memory_space<vmem>>) target_semaphore(%46 : memref<!tpu.dma_semaphore, #tpu.memory_space<semaphore_mem>>)
    %c4_i32 = arith.constant 4 : i32
    %47 = arith.addi %2, %c4_i32 : i32
    %c7_i32_27 = arith.constant 7 : i32
    %48 = arith.addi %2, %c7_i32_27 : i32
    %49 = arith.minsi %47, %48 : i32
    %50 = arith.index_cast %49 : i32 to index
    %51 = memref.load %arg2[%50] : memref<16xi32, #tpu.memory_space<smem>>
    %c0_i32_28 = arith.constant 0 : i32
    %52 = arith.maxsi %51, %c0_i32_28 : i32
    %c63_i32_29 = arith.constant 63 : i32
    %53 = arith.minsi %52, %c63_i32_29 : i32
    %c4_i32_30 = arith.constant 4 : i32
    %c0_i32_31 = arith.constant 0 : i32
    %54 = tpu.memref_slice %arg3[%53, %c0_i32_31] : memref<64x128xf32, #tpu.memory_space<any>> -> memref<1x128xf32, #tpu.memory_space<any>>
    %c4_i32_32 = arith.constant 4 : i32
    %c0_i32_33 = arith.constant 0 : i32
    %55 = tpu.memref_slice %arg6[%c4_i32_32, %c0_i32_33] : memref<8x128xf32, #tpu.memory_space<vmem>> -> memref<1x128xf32, #tpu.memory_space<vmem>>
    %56 = tpu.memref_slice %arg7[%c4_i32_30] : memref<32x!tpu.dma_semaphore, #tpu.memory_space<semaphore_mem>> -> memref<1x!tpu.dma_semaphore, #tpu.memory_space<semaphore_mem>>
    %57 = tpu.memref_squeeze %56 : memref<1x!tpu.dma_semaphore, #tpu.memory_space<semaphore_mem>> -> memref<!tpu.dma_semaphore, #tpu.memory_space<semaphore_mem>>
    tpu.enqueue_dma source(%54 : memref<1x128xf32, #tpu.memory_space<any>>) target(%55 : memref<1x128xf32, #tpu.memory_space<vmem>>) target_semaphore(%57 : memref<!tpu.dma_semaphore, #tpu.memory_space<semaphore_mem>>)
    %c5_i32 = arith.constant 5 : i32
    %58 = arith.addi %2, %c5_i32 : i32
    %c7_i32_34 = arith.constant 7 : i32
    %59 = arith.addi %2, %c7_i32_34 : i32
    %60 = arith.minsi %58, %59 : i32
    %61 = arith.index_cast %60 : i32 to index
    %62 = memref.load %arg2[%61] : memref<16xi32, #tpu.memory_space<smem>>
    %c0_i32_35 = arith.constant 0 : i32
    %63 = arith.maxsi %62, %c0_i32_35 : i32
    %c63_i32_36 = arith.constant 63 : i32
    %64 = arith.minsi %63, %c63_i32_36 : i32
    %c5_i32_37 = arith.constant 5 : i32
    %c0_i32_38 = arith.constant 0 : i32
    %65 = tpu.memref_slice %arg3[%64, %c0_i32_38] : memref<64x128xf32, #tpu.memory_space<any>> -> memref<1x128xf32, #tpu.memory_space<any>>
    %c5_i32_39 = arith.constant 5 : i32
    %c0_i32_40 = arith.constant 0 : i32
    %66 = tpu.memref_slice %arg6[%c5_i32_39, %c0_i32_40] : memref<8x128xf32, #tpu.memory_space<vmem>> -> memref<1x128xf32, #tpu.memory_space<vmem>>
    %67 = tpu.memref_slice %arg7[%c5_i32_37] : memref<32x!tpu.dma_semaphore, #tpu.memory_space<semaphore_mem>> -> memref<1x!tpu.dma_semaphore, #tpu.memory_space<semaphore_mem>>
    %68 = tpu.memref_squeeze %67 : memref<1x!tpu.dma_semaphore, #tpu.memory_space<semaphore_mem>> -> memref<!tpu.dma_semaphore, #tpu.memory_space<semaphore_mem>>
    tpu.enqueue_dma source(%65 : memref<1x128xf32, #tpu.memory_space<any>>) target(%66 : memref<1x128xf32, #tpu.memory_space<vmem>>) target_semaphore(%68 : memref<!tpu.dma_semaphore, #tpu.memory_space<semaphore_mem>>)
    %c6_i32 = arith.constant 6 : i32
    %69 = arith.addi %2, %c6_i32 : i32
    %c7_i32_41 = arith.constant 7 : i32
    %70 = arith.addi %2, %c7_i32_41 : i32
    %71 = arith.minsi %69, %70 : i32
    %72 = arith.index_cast %71 : i32 to index
    %73 = memref.load %arg2[%72] : memref<16xi32, #tpu.memory_space<smem>>
    %c0_i32_42 = arith.constant 0 : i32
    %74 = arith.maxsi %73, %c0_i32_42 : i32
    %c63_i32_43 = arith.constant 63 : i32
    %75 = arith.minsi %74, %c63_i32_43 : i32
    %c6_i32_44 = arith.constant 6 : i32
    %c0_i32_45 = arith.constant 0 : i32
    %76 = tpu.memref_slice %arg3[%75, %c0_i32_45] : memref<64x128xf32, #tpu.memory_space<any>> -> memref<1x128xf32, #tpu.memory_space<any>>
    %c6_i32_46 = arith.constant 6 : i32
    %c0_i32_47 = arith.constant 0 : i32
    %77 = tpu.memref_slice %arg6[%c6_i32_46, %c0_i32_47] : memref<8x128xf32, #tpu.memory_space<vmem>> -> memref<1x128xf32, #tpu.memory_space<vmem>>
    %78 = tpu.memref_slice %arg7[%c6_i32_44] : memref<32x!tpu.dma_semaphore, #tpu.memory_space<semaphore_mem>> -> memref<1x!tpu.dma_semaphore, #tpu.memory_space<semaphore_mem>>
    %79 = tpu.memref_squeeze %78 : memref<1x!tpu.dma_semaphore, #tpu.memory_space<semaphore_mem>> -> memref<!tpu.dma_semaphore, #tpu.memory_space<semaphore_mem>>
    tpu.enqueue_dma source(%76 : memref<1x128xf32, #tpu.memory_space<any>>) target(%77 : memref<1x128xf32, #tpu.memory_space<vmem>>) target_semaphore(%79 : memref<!tpu.dma_semaphore, #tpu.memory_space<semaphore_mem>>)
    %c7_i32_48 = arith.constant 7 : i32
    %80 = arith.addi %2, %c7_i32_48 : i32
    %c7_i32_49 = arith.constant 7 : i32
    %81 = arith.addi %2, %c7_i32_49 : i32
    %82 = arith.minsi %80, %81 : i32
    %83 = arith.index_cast %82 : i32 to index
    %84 = memref.load %arg2[%83] : memref<16xi32, #tpu.memory_space<smem>>
    %c0_i32_50 = arith.constant 0 : i32
    %85 = arith.maxsi %84, %c0_i32_50 : i32
    %c63_i32_51 = arith.constant 63 : i32
    %86 = arith.minsi %85, %c63_i32_51 : i32
    %c7_i32_52 = arith.constant 7 : i32
    %c0_i32_53 = arith.constant 0 : i32
    %87 = tpu.memref_slice %arg3[%86, %c0_i32_53] : memref<64x128xf32, #tpu.memory_space<any>> -> memref<1x128xf32, #tpu.memory_space<any>>
    %c7_i32_54 = arith.constant 7 : i32
    %c0_i32_55 = arith.constant 0 : i32
    %88 = tpu.memref_slice %arg6[%c7_i32_54, %c0_i32_55] : memref<8x128xf32, #tpu.memory_space<vmem>> -> memref<1x128xf32, #tpu.memory_space<vmem>>
    %89 = tpu.memref_slice %arg7[%c7_i32_52] : memref<32x!tpu.dma_semaphore, #tpu.memory_space<semaphore_mem>> -> memref<1x!tpu.dma_semaphore, #tpu.memory_space<semaphore_mem>>
    %90 = tpu.memref_squeeze %89 : memref<1x!tpu.dma_semaphore, #tpu.memory_space<semaphore_mem>> -> memref<!tpu.dma_semaphore, #tpu.memory_space<semaphore_mem>>
    tpu.enqueue_dma source(%87 : memref<1x128xf32, #tpu.memory_space<any>>) target(%88 : memref<1x128xf32, #tpu.memory_space<vmem>>) target_semaphore(%90 : memref<!tpu.dma_semaphore, #tpu.memory_space<semaphore_mem>>)
    %c0_i32_56 = arith.constant 0 : i32
    %c8_i32_57 = arith.constant 8 : i32
    %91 = arith.muli %c0_i32_56, %c8_i32_57 : i32
    %92 = tpu.assume_multiple %91, 8 : i32
    %c4_i32_58 = arith.constant 4 : i32
    %93 = arith.addi %c0_i32_56, %c4_i32_58 : i32
    %c8_i32_59 = arith.constant 8 : i32
    %94 = arith.muli %93, %c8_i32_59 : i32
    %c0_i32_60 = arith.constant 0 : i32
    %95 = arith.addi %94, %c0_i32_60 : i32
    %96 = arith.addi %2, %95 : i32
    %c7_i32_61 = arith.constant 7 : i32
    %97 = arith.addi %2, %c7_i32_61 : i32
    %98 = arith.minsi %96, %97 : i32
    %99 = arith.index_cast %98 : i32 to index
    %100 = memref.load %arg2[%99] : memref<16xi32, #tpu.memory_space<smem>>
    %c0_i32_62 = arith.constant 0 : i32
    %101 = arith.maxsi %100, %c0_i32_62 : i32
    %c63_i32_63 = arith.constant 63 : i32
    %102 = arith.minsi %101, %c63_i32_63 : i32
    %c1_i32_64 = arith.constant 1 : i32
    %103 = arith.addi %94, %c1_i32_64 : i32
    %104 = arith.addi %2, %103 : i32
    %c7_i32_65 = arith.constant 7 : i32
    %105 = arith.addi %2, %c7_i32_65 : i32
    %106 = arith.minsi %104, %105 : i32
    %107 = arith.index_cast %106 : i32 to index
    %108 = memref.load %arg2[%107] : memref<16xi32, #tpu.memory_space<smem>>
    %c0_i32_66 = arith.constant 0 : i32
    %109 = arith.maxsi %108, %c0_i32_66 : i32
    %c63_i32_67 = arith.constant 63 : i32
    %110 = arith.minsi %109, %c63_i32_67 : i32
    %c2_i32_68 = arith.constant 2 : i32
    %111 = arith.addi %94, %c2_i32_68 : i32
    %112 = arith.addi %2, %111 : i32
    %c7_i32_69 = arith.constant 7 : i32
    %113 = arith.addi %2, %c7_i32_69 : i32
    %114 = arith.minsi %112, %113 : i32
    %115 = arith.index_cast %114 : i32 to index
    %116 = memref.load %arg2[%115] : memref<16xi32, #tpu.memory_space<smem>>
    %c0_i32_70 = arith.constant 0 : i32
    %117 = arith.maxsi %116, %c0_i32_70 : i32
    %c63_i32_71 = arith.constant 63 : i32
    %118 = arith.minsi %117, %c63_i32_71 : i32
    %c3_i32_72 = arith.constant 3 : i32
    %119 = arith.addi %94, %c3_i32_72 : i32
    %120 = arith.addi %2, %119 : i32
    %c7_i32_73 = arith.constant 7 : i32
    %121 = arith.addi %2, %c7_i32_73 : i32
    %122 = arith.minsi %120, %121 : i32
    %123 = arith.index_cast %122 : i32 to index
    %124 = memref.load %arg2[%123] : memref<16xi32, #tpu.memory_space<smem>>
    %c0_i32_74 = arith.constant 0 : i32
    %125 = arith.maxsi %124, %c0_i32_74 : i32
    %c63_i32_75 = arith.constant 63 : i32
    %126 = arith.minsi %125, %c63_i32_75 : i32
    %c4_i32_76 = arith.constant 4 : i32
    %127 = arith.addi %94, %c4_i32_76 : i32
    %128 = arith.addi %2, %127 : i32
    %c7_i32_77 = arith.constant 7 : i32
    %129 = arith.addi %2, %c7_i32_77 : i32
    %130 = arith.minsi %128, %129 : i32
    %131 = arith.index_cast %130 : i32 to index
    %132 = memref.load %arg2[%131] : memref<16xi32, #tpu.memory_space<smem>>
    %c0_i32_78 = arith.constant 0 : i32
    %133 = arith.maxsi %132, %c0_i32_78 : i32
    %c63_i32_79 = arith.constant 63 : i32
    %134 = arith.minsi %133, %c63_i32_79 : i32
    %c5_i32_80 = arith.constant 5 : i32
    %135 = arith.addi %94, %c5_i32_80 : i32
    %136 = arith.addi %2, %135 : i32
    %c7_i32_81 = arith.constant 7 : i32
    %137 = arith.addi %2, %c7_i32_81 : i32
    %138 = arith.minsi %136, %137 : i32
    %139 = arith.index_cast %138 : i32 to index
    %140 = memref.load %arg2[%139] : memref<16xi32, #tpu.memory_space<smem>>
    %c0_i32_82 = arith.constant 0 : i32
    %141 = arith.maxsi %140, %c0_i32_82 : i32
    %c63_i32_83 = arith.constant 63 : i32
    %142 = arith.minsi %141, %c63_i32_83 : i32
    %c6_i32_84 = arith.constant 6 : i32
    %143 = arith.addi %94, %c6_i32_84 : i32
    %144 = arith.addi %2, %143 : i32
    %c7_i32_85 = arith.constant 7 : i32
    %145 = arith.addi %2, %c7_i32_85 : i32
    %146 = arith.minsi %144, %145 : i32
    %147 = arith.index_cast %146 : i32 to index
    %148 = memref.load %arg2[%147] : memref<16xi32, #tpu.memory_space<smem>>
    %c0_i32_86 = arith.constant 0 : i32
    %149 = arith.maxsi %148, %c0_i32_86 : i32
    %c63_i32_87 = arith.constant 63 : i32
    %150 = arith.minsi %149, %c63_i32_87 : i32
    %c7_i32_88 = arith.constant 7 : i32
    %151 = arith.addi %94, %c7_i32_88 : i32
    %152 = arith.addi %2, %151 : i32
    %c7_i32_89 = arith.constant 7 : i32
    %153 = arith.addi %2, %c7_i32_89 : i32
    %154 = arith.minsi %152, %153 : i32
    %155 = arith.index_cast %154 : i32 to index
    %156 = memref.load %arg2[%155] : memref<16xi32, #tpu.memory_space<smem>>
    %c0_i32_90 = arith.constant 0 : i32
    %157 = arith.maxsi %156, %c0_i32_90 : i32
    %c63_i32_91 = arith.constant 63 : i32
    %158 = arith.minsi %157, %c63_i32_91 : i32
    %c0_i32_92 = arith.constant 0 : i32
    %159 = arith.addi %92, %c0_i32_92 : i32
    %c31_i32 = arith.constant 31 : i32
    %160 = arith.andi %159, %c31_i32 : i32
    %c0_i32_93 = arith.constant 0 : i32
    %c0_i32_94 = arith.constant 0 : i32
    %161 = tpu.memref_slice %arg3[%c0_i32_93, %c0_i32_94] : memref<64x128xf32, #tpu.memory_space<any>> -> memref<1x128xf32, #tpu.memory_space<any>>
    %c0_i32_95 = arith.constant 0 : i32
    %162 = tpu.memref_slice %arg6[%159, %c0_i32_95] : memref<8x128xf32, #tpu.memory_space<vmem>> -> memref<1x128xf32, #tpu.memory_space<vmem>>
    %163 = tpu.memref_slice %arg7[%160] : memref<32x!tpu.dma_semaphore, #tpu.memory_space<semaphore_mem>> -> memref<1x!tpu.dma_semaphore, #tpu.memory_space<semaphore_mem>>
    %164 = tpu.memref_squeeze %163 : memref<1x!tpu.dma_semaphore, #tpu.memory_space<semaphore_mem>> -> memref<!tpu.dma_semaphore, #tpu.memory_space<semaphore_mem>>
    tpu.wait_dma2 semaphore(%164 : memref<!tpu.dma_semaphore, #tpu.memory_space<semaphore_mem>>) src(%161 : memref<1x128xf32, #tpu.memory_space<any>>) dst(%162 : memref<1x128xf32, #tpu.memory_space<vmem>>)
    %c1_i32_96 = arith.constant 1 : i32
    %165 = arith.addi %92, %c1_i32_96 : i32
    %c31_i32_97 = arith.constant 31 : i32
    %166 = arith.andi %165, %c31_i32_97 : i32
    %c0_i32_98 = arith.constant 0 : i32
    %c0_i32_99 = arith.constant 0 : i32
    %167 = tpu.memref_slice %arg3[%c0_i32_98, %c0_i32_99] : memref<64x128xf32, #tpu.memory_space<any>> -> memref<1x128xf32, #tpu.memory_space<any>>
    %c0_i32_100 = arith.constant 0 : i32
    %168 = tpu.memref_slice %arg6[%165, %c0_i32_100] : memref<8x128xf32, #tpu.memory_space<vmem>> -> memref<1x128xf32, #tpu.memory_space<vmem>>
    %169 = tpu.memref_slice %arg7[%166] : memref<32x!tpu.dma_semaphore, #tpu.memory_space<semaphore_mem>> -> memref<1x!tpu.dma_semaphore, #tpu.memory_space<semaphore_mem>>
    %170 = tpu.memref_squeeze %169 : memref<1x!tpu.dma_semaphore, #tpu.memory_space<semaphore_mem>> -> memref<!tpu.dma_semaphore, #tpu.memory_space<semaphore_mem>>
    tpu.wait_dma2 semaphore(%170 : memref<!tpu.dma_semaphore, #tpu.memory_space<semaphore_mem>>) src(%167 : memref<1x128xf32, #tpu.memory_space<any>>) dst(%168 : memref<1x128xf32, #tpu.memory_space<vmem>>)
    %c2_i32_101 = arith.constant 2 : i32
    %171 = arith.addi %92, %c2_i32_101 : i32
    %c31_i32_102 = arith.constant 31 : i32
    %172 = arith.andi %171, %c31_i32_102 : i32
    %c0_i32_103 = arith.constant 0 : i32
    %c0_i32_104 = arith.constant 0 : i32
    %173 = tpu.memref_slice %arg3[%c0_i32_103, %c0_i32_104] : memref<64x128xf32, #tpu.memory_space<any>> -> memref<1x128xf32, #tpu.memory_space<any>>
    %c0_i32_105 = arith.constant 0 : i32
    %174 = tpu.memref_slice %arg6[%171, %c0_i32_105] : memref<8x128xf32, #tpu.memory_space<vmem>> -> memref<1x128xf32, #tpu.memory_space<vmem>>
    %175 = tpu.memref_slice %arg7[%172] : memref<32x!tpu.dma_semaphore, #tpu.memory_space<semaphore_mem>> -> memref<1x!tpu.dma_semaphore, #tpu.memory_space<semaphore_mem>>
    %176 = tpu.memref_squeeze %175 : memref<1x!tpu.dma_semaphore, #tpu.memory_space<semaphore_mem>> -> memref<!tpu.dma_semaphore, #tpu.memory_space<semaphore_mem>>
    tpu.wait_dma2 semaphore(%176 : memref<!tpu.dma_semaphore, #tpu.memory_space<semaphore_mem>>) src(%173 : memref<1x128xf32, #tpu.memory_space<any>>) dst(%174 : memref<1x128xf32, #tpu.memory_space<vmem>>)
    %c3_i32_106 = arith.constant 3 : i32
    %177 = arith.addi %92, %c3_i32_106 : i32
    %c31_i32_107 = arith.constant 31 : i32
    %178 = arith.andi %177, %c31_i32_107 : i32
    %c0_i32_108 = arith.constant 0 : i32
    %c0_i32_109 = arith.constant 0 : i32
    %179 = tpu.memref_slice %arg3[%c0_i32_108, %c0_i32_109] : memref<64x128xf32, #tpu.memory_space<any>> -> memref<1x128xf32, #tpu.memory_space<any>>
    %c0_i32_110 = arith.constant 0 : i32
    %180 = tpu.memref_slice %arg6[%177, %c0_i32_110] : memref<8x128xf32, #tpu.memory_space<vmem>> -> memref<1x128xf32, #tpu.memory_space<vmem>>
    %181 = tpu.memref_slice %arg7[%178] : memref<32x!tpu.dma_semaphore, #tpu.memory_space<semaphore_mem>> -> memref<1x!tpu.dma_semaphore, #tpu.memory_space<semaphore_mem>>
    %182 = tpu.memref_squeeze %181 : memref<1x!tpu.dma_semaphore, #tpu.memory_space<semaphore_mem>> -> memref<!tpu.dma_semaphore, #tpu.memory_space<semaphore_mem>>
    tpu.wait_dma2 semaphore(%182 : memref<!tpu.dma_semaphore, #tpu.memory_space<semaphore_mem>>) src(%179 : memref<1x128xf32, #tpu.memory_space<any>>) dst(%180 : memref<1x128xf32, #tpu.memory_space<vmem>>)
    %c4_i32_111 = arith.constant 4 : i32
    %183 = arith.addi %92, %c4_i32_111 : i32
    %c31_i32_112 = arith.constant 31 : i32
    %184 = arith.andi %183, %c31_i32_112 : i32
    %c0_i32_113 = arith.constant 0 : i32
    %c0_i32_114 = arith.constant 0 : i32
    %185 = tpu.memref_slice %arg3[%c0_i32_113, %c0_i32_114] : memref<64x128xf32, #tpu.memory_space<any>> -> memref<1x128xf32, #tpu.memory_space<any>>
    %c0_i32_115 = arith.constant 0 : i32
    %186 = tpu.memref_slice %arg6[%183, %c0_i32_115] : memref<8x128xf32, #tpu.memory_space<vmem>> -> memref<1x128xf32, #tpu.memory_space<vmem>>
    %187 = tpu.memref_slice %arg7[%184] : memref<32x!tpu.dma_semaphore, #tpu.memory_space<semaphore_mem>> -> memref<1x!tpu.dma_semaphore, #tpu.memory_space<semaphore_mem>>
    %188 = tpu.memref_squeeze %187 : memref<1x!tpu.dma_semaphore, #tpu.memory_space<semaphore_mem>> -> memref<!tpu.dma_semaphore, #tpu.memory_space<semaphore_mem>>
    tpu.wait_dma2 semaphore(%188 : memref<!tpu.dma_semaphore, #tpu.memory_space<semaphore_mem>>) src(%185 : memref<1x128xf32, #tpu.memory_space<any>>) dst(%186 : memref<1x128xf32, #tpu.memory_space<vmem>>)
    %c5_i32_116 = arith.constant 5 : i32
    %189 = arith.addi %92, %c5_i32_116 : i32
    %c31_i32_117 = arith.constant 31 : i32
    %190 = arith.andi %189, %c31_i32_117 : i32
    %c0_i32_118 = arith.constant 0 : i32
    %c0_i32_119 = arith.constant 0 : i32
    %191 = tpu.memref_slice %arg3[%c0_i32_118, %c0_i32_119] : memref<64x128xf32, #tpu.memory_space<any>> -> memref<1x128xf32, #tpu.memory_space<any>>
    %c0_i32_120 = arith.constant 0 : i32
    %192 = tpu.memref_slice %arg6[%189, %c0_i32_120] : memref<8x128xf32, #tpu.memory_space<vmem>> -> memref<1x128xf32, #tpu.memory_space<vmem>>
    %193 = tpu.memref_slice %arg7[%190] : memref<32x!tpu.dma_semaphore, #tpu.memory_space<semaphore_mem>> -> memref<1x!tpu.dma_semaphore, #tpu.memory_space<semaphore_mem>>
    %194 = tpu.memref_squeeze %193 : memref<1x!tpu.dma_semaphore, #tpu.memory_space<semaphore_mem>> -> memref<!tpu.dma_semaphore, #tpu.memory_space<semaphore_mem>>
    tpu.wait_dma2 semaphore(%194 : memref<!tpu.dma_semaphore, #tpu.memory_space<semaphore_mem>>) src(%191 : memref<1x128xf32, #tpu.memory_space<any>>) dst(%192 : memref<1x128xf32, #tpu.memory_space<vmem>>)
    %c6_i32_121 = arith.constant 6 : i32
    %195 = arith.addi %92, %c6_i32_121 : i32
    %c31_i32_122 = arith.constant 31 : i32
    %196 = arith.andi %195, %c31_i32_122 : i32
    %c0_i32_123 = arith.constant 0 : i32
    %c0_i32_124 = arith.constant 0 : i32
    %197 = tpu.memref_slice %arg3[%c0_i32_123, %c0_i32_124] : memref<64x128xf32, #tpu.memory_space<any>> -> memref<1x128xf32, #tpu.memory_space<any>>
    %c0_i32_125 = arith.constant 0 : i32
    %198 = tpu.memref_slice %arg6[%195, %c0_i32_125] : memref<8x128xf32, #tpu.memory_space<vmem>> -> memref<1x128xf32, #tpu.memory_space<vmem>>
    %199 = tpu.memref_slice %arg7[%196] : memref<32x!tpu.dma_semaphore, #tpu.memory_space<semaphore_mem>> -> memref<1x!tpu.dma_semaphore, #tpu.memory_space<semaphore_mem>>
    %200 = tpu.memref_squeeze %199 : memref<1x!tpu.dma_semaphore, #tpu.memory_space<semaphore_mem>> -> memref<!tpu.dma_semaphore, #tpu.memory_space<semaphore_mem>>
    tpu.wait_dma2 semaphore(%200 : memref<!tpu.dma_semaphore, #tpu.memory_space<semaphore_mem>>) src(%197 : memref<1x128xf32, #tpu.memory_space<any>>) dst(%198 : memref<1x128xf32, #tpu.memory_space<vmem>>)
    %c7_i32_126 = arith.constant 7 : i32
    %201 = arith.addi %92, %c7_i32_126 : i32
    %c31_i32_127 = arith.constant 31 : i32
    %202 = arith.andi %201, %c31_i32_127 : i32
    %c0_i32_128 = arith.constant 0 : i32
    %c0_i32_129 = arith.constant 0 : i32
    %203 = tpu.memref_slice %arg3[%c0_i32_128, %c0_i32_129] : memref<64x128xf32, #tpu.memory_space<any>> -> memref<1x128xf32, #tpu.memory_space<any>>
    %c0_i32_130 = arith.constant 0 : i32
    %204 = tpu.memref_slice %arg6[%201, %c0_i32_130] : memref<8x128xf32, #tpu.memory_space<vmem>> -> memref<1x128xf32, #tpu.memory_space<vmem>>
    %205 = tpu.memref_slice %arg7[%202] : memref<32x!tpu.dma_semaphore, #tpu.memory_space<semaphore_mem>> -> memref<1x!tpu.dma_semaphore, #tpu.memory_space<semaphore_mem>>
    %206 = tpu.memref_squeeze %205 : memref<1x!tpu.dma_semaphore, #tpu.memory_space<semaphore_mem>> -> memref<!tpu.dma_semaphore, #tpu.memory_space<semaphore_mem>>
    tpu.wait_dma2 semaphore(%206 : memref<!tpu.dma_semaphore, #tpu.memory_space<semaphore_mem>>) src(%203 : memref<1x128xf32, #tpu.memory_space<any>>) dst(%204 : memref<1x128xf32, #tpu.memory_space<vmem>>)
    %c1_i32_131 = arith.constant 1 : i32
    %207 = arith.cmpi slt, %93, %c1_i32_131 : i32
    %208 = arith.extui %207 : i1 to i32
    %c0_i32_132 = arith.constant 0 : i32
    %209 = arith.cmpi ne, %208, %c0_i32_132 : i32
    scf.if %209 {
      %c0_i32_137 = arith.constant 0 : i32
      %219 = arith.addi %94, %c0_i32_137 : i32
      %c31_i32_138 = arith.constant 31 : i32
      %220 = arith.andi %219, %c31_i32_138 : i32
      %c0_i32_139 = arith.constant 0 : i32
      %221 = tpu.memref_slice %arg3[%102, %c0_i32_139] : memref<64x128xf32, #tpu.memory_space<any>> -> memref<1x128xf32, #tpu.memory_space<any>>
      %c0_i32_140 = arith.constant 0 : i32
      %222 = tpu.memref_slice %arg6[%219, %c0_i32_140] : memref<8x128xf32, #tpu.memory_space<vmem>> -> memref<1x128xf32, #tpu.memory_space<vmem>>
      %223 = tpu.memref_slice %arg7[%220] : memref<32x!tpu.dma_semaphore, #tpu.memory_space<semaphore_mem>> -> memref<1x!tpu.dma_semaphore, #tpu.memory_space<semaphore_mem>>
      %224 = tpu.memref_squeeze %223 : memref<1x!tpu.dma_semaphore, #tpu.memory_space<semaphore_mem>> -> memref<!tpu.dma_semaphore, #tpu.memory_space<semaphore_mem>>
      tpu.enqueue_dma source(%221 : memref<1x128xf32, #tpu.memory_space<any>>) target(%222 : memref<1x128xf32, #tpu.memory_space<vmem>>) target_semaphore(%224 : memref<!tpu.dma_semaphore, #tpu.memory_space<semaphore_mem>>)
      %c1_i32_141 = arith.constant 1 : i32
      %225 = arith.addi %94, %c1_i32_141 : i32
      %c31_i32_142 = arith.constant 31 : i32
      %226 = arith.andi %225, %c31_i32_142 : i32
      %c0_i32_143 = arith.constant 0 : i32
      %227 = tpu.memref_slice %arg3[%110, %c0_i32_143] : memref<64x128xf32, #tpu.memory_space<any>> -> memref<1x128xf32, #tpu.memory_space<any>>
      %c0_i32_144 = arith.constant 0 : i32
      %228 = tpu.memref_slice %arg6[%225, %c0_i32_144] : memref<8x128xf32, #tpu.memory_space<vmem>> -> memref<1x128xf32, #tpu.memory_space<vmem>>
      %229 = tpu.memref_slice %arg7[%226] : memref<32x!tpu.dma_semaphore, #tpu.memory_space<semaphore_mem>> -> memref<1x!tpu.dma_semaphore, #tpu.memory_space<semaphore_mem>>
      %230 = tpu.memref_squeeze %229 : memref<1x!tpu.dma_semaphore, #tpu.memory_space<semaphore_mem>> -> memref<!tpu.dma_semaphore, #tpu.memory_space<semaphore_mem>>
      tpu.enqueue_dma source(%227 : memref<1x128xf32, #tpu.memory_space<any>>) target(%228 : memref<1x128xf32, #tpu.memory_space<vmem>>) target_semaphore(%230 : memref<!tpu.dma_semaphore, #tpu.memory_space<semaphore_mem>>)
      %c2_i32_145 = arith.constant 2 : i32
      %231 = arith.addi %94, %c2_i32_145 : i32
      %c31_i32_146 = arith.constant 31 : i32
      %232 = arith.andi %231, %c31_i32_146 : i32
      %c0_i32_147 = arith.constant 0 : i32
      %233 = tpu.memref_slice %arg3[%118, %c0_i32_147] : memref<64x128xf32, #tpu.memory_space<any>> -> memref<1x128xf32, #tpu.memory_space<any>>
      %c0_i32_148 = arith.constant 0 : i32
      %234 = tpu.memref_slice %arg6[%231, %c0_i32_148] : memref<8x128xf32, #tpu.memory_space<vmem>> -> memref<1x128xf32, #tpu.memory_space<vmem>>
      %235 = tpu.memref_slice %arg7[%232] : memref<32x!tpu.dma_semaphore, #tpu.memory_space<semaphore_mem>> -> memref<1x!tpu.dma_semaphore, #tpu.memory_space<semaphore_mem>>
      %236 = tpu.memref_squeeze %235 : memref<1x!tpu.dma_semaphore, #tpu.memory_space<semaphore_mem>> -> memref<!tpu.dma_semaphore, #tpu.memory_space<semaphore_mem>>
      tpu.enqueue_dma source(%233 : memref<1x128xf32, #tpu.memory_space<any>>) target(%234 : memref<1x128xf32, #tpu.memory_space<vmem>>) target_semaphore(%236 : memref<!tpu.dma_semaphore, #tpu.memory_space<semaphore_mem>>)
      %c3_i32_149 = arith.constant 3 : i32
      %237 = arith.addi %94, %c3_i32_149 : i32
      %c31_i32_150 = arith.constant 31 : i32
      %238 = arith.andi %237, %c31_i32_150 : i32
      %c0_i32_151 = arith.constant 0 : i32
      %239 = tpu.memref_slice %arg3[%126, %c0_i32_151] : memref<64x128xf32, #tpu.memory_space<any>> -> memref<1x128xf32, #tpu.memory_space<any>>
      %c0_i32_152 = arith.constant 0 : i32
      %240 = tpu.memref_slice %arg6[%237, %c0_i32_152] : memref<8x128xf32, #tpu.memory_space<vmem>> -> memref<1x128xf32, #tpu.memory_space<vmem>>
      %241 = tpu.memref_slice %arg7[%238] : memref<32x!tpu.dma_semaphore, #tpu.memory_space<semaphore_mem>> -> memref<1x!tpu.dma_semaphore, #tpu.memory_space<semaphore_mem>>
      %242 = tpu.memref_squeeze %241 : memref<1x!tpu.dma_semaphore, #tpu.memory_space<semaphore_mem>> -> memref<!tpu.dma_semaphore, #tpu.memory_space<semaphore_mem>>
      tpu.enqueue_dma source(%239 : memref<1x128xf32, #tpu.memory_space<any>>) target(%240 : memref<1x128xf32, #tpu.memory_space<vmem>>) target_semaphore(%242 : memref<!tpu.dma_semaphore, #tpu.memory_space<semaphore_mem>>)
      %c4_i32_153 = arith.constant 4 : i32
      %243 = arith.addi %94, %c4_i32_153 : i32
      %c31_i32_154 = arith.constant 31 : i32
      %244 = arith.andi %243, %c31_i32_154 : i32
      %c0_i32_155 = arith.constant 0 : i32
      %245 = tpu.memref_slice %arg3[%134, %c0_i32_155] : memref<64x128xf32, #tpu.memory_space<any>> -> memref<1x128xf32, #tpu.memory_space<any>>
      %c0_i32_156 = arith.constant 0 : i32
      %246 = tpu.memref_slice %arg6[%243, %c0_i32_156] : memref<8x128xf32, #tpu.memory_space<vmem>> -> memref<1x128xf32, #tpu.memory_space<vmem>>
      %247 = tpu.memref_slice %arg7[%244] : memref<32x!tpu.dma_semaphore, #tpu.memory_space<semaphore_mem>> -> memref<1x!tpu.dma_semaphore, #tpu.memory_space<semaphore_mem>>
      %248 = tpu.memref_squeeze %247 : memref<1x!tpu.dma_semaphore, #tpu.memory_space<semaphore_mem>> -> memref<!tpu.dma_semaphore, #tpu.memory_space<semaphore_mem>>
      tpu.enqueue_dma source(%245 : memref<1x128xf32, #tpu.memory_space<any>>) target(%246 : memref<1x128xf32, #tpu.memory_space<vmem>>) target_semaphore(%248 : memref<!tpu.dma_semaphore, #tpu.memory_space<semaphore_mem>>)
      %c5_i32_157 = arith.constant 5 : i32
      %249 = arith.addi %94, %c5_i32_157 : i32
      %c31_i32_158 = arith.constant 31 : i32
      %250 = arith.andi %249, %c31_i32_158 : i32
      %c0_i32_159 = arith.constant 0 : i32
      %251 = tpu.memref_slice %arg3[%142, %c0_i32_159] : memref<64x128xf32, #tpu.memory_space<any>> -> memref<1x128xf32, #tpu.memory_space<any>>
      %c0_i32_160 = arith.constant 0 : i32
      %252 = tpu.memref_slice %arg6[%249, %c0_i32_160] : memref<8x128xf32, #tpu.memory_space<vmem>> -> memref<1x128xf32, #tpu.memory_space<vmem>>
      %253 = tpu.memref_slice %arg7[%250] : memref<32x!tpu.dma_semaphore, #tpu.memory_space<semaphore_mem>> -> memref<1x!tpu.dma_semaphore, #tpu.memory_space<semaphore_mem>>
      %254 = tpu.memref_squeeze %253 : memref<1x!tpu.dma_semaphore, #tpu.memory_space<semaphore_mem>> -> memref<!tpu.dma_semaphore, #tpu.memory_space<semaphore_mem>>
      tpu.enqueue_dma source(%251 : memref<1x128xf32, #tpu.memory_space<any>>) target(%252 : memref<1x128xf32, #tpu.memory_space<vmem>>) target_semaphore(%254 : memref<!tpu.dma_semaphore, #tpu.memory_space<semaphore_mem>>)
      %c6_i32_161 = arith.constant 6 : i32
      %255 = arith.addi %94, %c6_i32_161 : i32
      %c31_i32_162 = arith.constant 31 : i32
      %256 = arith.andi %255, %c31_i32_162 : i32
      %c0_i32_163 = arith.constant 0 : i32
      %257 = tpu.memref_slice %arg3[%150, %c0_i32_163] : memref<64x128xf32, #tpu.memory_space<any>> -> memref<1x128xf32, #tpu.memory_space<any>>
      %c0_i32_164 = arith.constant 0 : i32
      %258 = tpu.memref_slice %arg6[%255, %c0_i32_164] : memref<8x128xf32, #tpu.memory_space<vmem>> -> memref<1x128xf32, #tpu.memory_space<vmem>>
      %259 = tpu.memref_slice %arg7[%256] : memref<32x!tpu.dma_semaphore, #tpu.memory_space<semaphore_mem>> -> memref<1x!tpu.dma_semaphore, #tpu.memory_space<semaphore_mem>>
      %260 = tpu.memref_squeeze %259 : memref<1x!tpu.dma_semaphore, #tpu.memory_space<semaphore_mem>> -> memref<!tpu.dma_semaphore, #tpu.memory_space<semaphore_mem>>
      tpu.enqueue_dma source(%257 : memref<1x128xf32, #tpu.memory_space<any>>) target(%258 : memref<1x128xf32, #tpu.memory_space<vmem>>) target_semaphore(%260 : memref<!tpu.dma_semaphore, #tpu.memory_space<semaphore_mem>>)
      %c7_i32_165 = arith.constant 7 : i32
      %261 = arith.addi %94, %c7_i32_165 : i32
      %c31_i32_166 = arith.constant 31 : i32
      %262 = arith.andi %261, %c31_i32_166 : i32
      %c0_i32_167 = arith.constant 0 : i32
      %263 = tpu.memref_slice %arg3[%158, %c0_i32_167] : memref<64x128xf32, #tpu.memory_space<any>> -> memref<1x128xf32, #tpu.memory_space<any>>
      %c0_i32_168 = arith.constant 0 : i32
      %264 = tpu.memref_slice %arg6[%261, %c0_i32_168] : memref<8x128xf32, #tpu.memory_space<vmem>> -> memref<1x128xf32, #tpu.memory_space<vmem>>
      %265 = tpu.memref_slice %arg7[%262] : memref<32x!tpu.dma_semaphore, #tpu.memory_space<semaphore_mem>> -> memref<1x!tpu.dma_semaphore, #tpu.memory_space<semaphore_mem>>
      %266 = tpu.memref_squeeze %265 : memref<1x!tpu.dma_semaphore, #tpu.memory_space<semaphore_mem>> -> memref<!tpu.dma_semaphore, #tpu.memory_space<semaphore_mem>>
      tpu.enqueue_dma source(%263 : memref<1x128xf32, #tpu.memory_space<any>>) target(%264 : memref<1x128xf32, #tpu.memory_space<vmem>>) target_semaphore(%266 : memref<!tpu.dma_semaphore, #tpu.memory_space<semaphore_mem>>)
    } else {
    }
    %210 = arith.index_cast %92 : i32 to index
    %c0 = arith.constant 0 : index
    %211 = vector.load %arg6[%210, %c0] : memref<8x128xf32, #tpu.memory_space<vmem>>, vector<8x128xf32>
    %212 = arith.index_cast %92 : i32 to index
    %c0_133 = arith.constant 0 : index
    %213 = vector.load %arg4[%212, %c0_133] : memref<8x128xf32, #tpu.memory_space<vmem>>, vector<8x128xf32>
    %214 = arith.addf %211, %213 : vector<8x128xf32>
    %c0_134 = arith.constant 0 : index
    %215 = arith.index_cast %92 : i32 to index
    %c0_135 = arith.constant 0 : index
    %216 = vector.load %arg5[%c0_134, %215, %c0_135] : memref<1x8x128xf32, #tpu.memory_space<vmem>>, vector<1x8x128xf32>
    %217 = vector.shape_cast %216 : vector<1x8x128xf32> to vector<8x128xf32>
    %218 = vector.shape_cast %214 : vector<8x128xf32> to vector<1x8x128xf32>
    tpu.vector_store %arg5[%c0_134, %215, %c0_135], %218 {strides = array<i32>} : memref<1x8x128xf32, #tpu.memory_space<vmem>>, vector<1x8x128xf32>,
    %c1_i32_136 = arith.constant 1 : i32
    return
  }
  func.func @transform_1(%arg0: i32, %arg1: i32, %arg2: memref<16xi32, #tpu.memory_space<smem>>) -> (i32, i32) {
    %c0_i32 = arith.constant 0 : i32
    %c0_i32_0 = arith.constant 0 : i32
    return %arg1, %c0_i32 : i32, i32
  }
  func.func @transform_2(%arg0: i32, %arg1: i32, %arg2: memref<16xi32, #tpu.memory_space<smem>>) -> (i32, i32, i32) {
    %c0_i32 = arith.constant 0 : i32
    %c0_i32_0 = arith.constant 0 : i32
    return %arg0, %arg1, %c0_i32 : i32, i32, i32
  }
}

</mosaic_0001>

<llo_original>
// kernel: tpu_custom_call.1
$region0: #{tpu_custom_call.1}
  #allocation0 [shape = 'u32[]', space=smem, size = 0x4, offset = 0x4, fixed_abs, tag = 'smem constant byte address 0x4 - core index']
  #allocation1 [shape = 'u32[72,128]{1,0:T(1,128)}', space=vmem, size = 0x9000, scoped, tag = 'internal scratch']
  #allocation2 [shape = 'f32[8,128]{1,0:T(8,128)}', space=vmem, size = 0x1000, scoped, tag = 'scratch operand']
  #allocation3 [shape = 's32[32]{0}', space=sflag, size = 0x80, scoped, tag = 'scratch operand']
  #allocation4 [shape = 's32[1]{0}', space=sflag, size = 0x4, scoped, tag = 'scoped memory for tpu_custom_call.1']
  #allocation5 [shape = 'u8[512]{0}', space=smem, size = 0x200, scoped, tag = 'prefetched SMEM operand 0']
  #allocation10 [shape = 's32[]', space=sflag, size = 0x4, offset = 0, fixed_abs, tag = 'sflag constant byte address 0x0 - dummy sync flag']
  #allocation11 [shape = 's32[]', space=sflag, size = 0x4, offset = 0, fixed_abs, tag = 'sflag constant byte address 0x0 - dummy sync flag']
  #allocation12 [shape = 'u32[]', space=smem, size = 0x4, offset = 0x44, fixed_abs, tag = 'smem constant byte address 0x44 - assertion arg 0']
  #allocation13 [shape = 'u32[]', space=smem, size = 0x4, offset = 0x48, fixed_abs, tag = 'smem constant byte address 0x48 - assertion arg 1']
  #allocation14 [shape = 's32[]', space=sflag, size = 0x4, offset = 0, fixed_abs, tag = 'sflag constant byte address 0x0 - dummy sync flag']
  #allocation15 [shape = 's32[]', space=sflag, size = 0x4, offset = 0, fixed_abs, tag = 'sflag constant byte address 0x0 - dummy sync flag']
  #allocation16 [shape = 's32[]', space=sflag, size = 0x4, offset = 0, fixed_abs, tag = 'sflag constant byte address 0x0 - dummy sync flag']
  #allocation17 [shape = 's32[]', space=sflag, size = 0x4, offset = 0, fixed_abs, tag = 'sflag constant byte address 0x0 - dummy sync flag']
  #allocation18 [shape = 's32[]', space=sflag, size = 0x4, offset = 0, fixed_abs, tag = 'sflag constant byte address 0x0 - dummy sync flag']
  #allocation19 [shape = 's32[]', space=sflag, size = 0x4, offset = 0, fixed_abs, tag = 'sflag constant byte address 0x0 - dummy sync flag']
  #allocation20 [shape = 's32[]', space=sflag, size = 0x4, offset = 0, fixed_abs, tag = 'sflag constant byte address 0x0 - dummy sync flag']
  #allocation21 [shape = 's32[]', space=sflag, size = 0x4, offset = 0, fixed_abs, tag = 'sflag constant byte address 0x0 - dummy sync flag']
  #allocation22 [shape = 's32[]', space=sflag, size = 0x4, offset = 0, fixed_abs, tag = 'sflag constant byte address 0x0 - dummy sync flag']
  #allocation23 [shape = 's32[]', space=sflag, size = 0x4, offset = 0, fixed_abs, tag = 'sflag constant byte address 0x0 - dummy sync flag']
  #allocation24 [shape = 's32[]', space=sflag, size = 0x4, offset = 0, fixed_abs, tag = 'sflag constant byte address 0x0 - dummy sync flag']
  #allocation25 [shape = 's32[]', space=sflag, size = 0x4, offset = 0, fixed_abs, tag = 'sflag constant byte address 0x0 - dummy sync flag']
  #allocation26 [shape = 's32[]', space=sflag, size = 0x4, offset = 0, fixed_abs, tag = 'sflag constant byte address 0x0 - dummy sync flag']
  #allocation27 [shape = 's32[]', space=sflag, size = 0x4, offset = 0, fixed_abs, tag = 'sflag constant byte address 0x0 - dummy sync flag']
  %s0 = inlined_call_operand.hbm [shape: s32[16], index: 0, kind: input, shape index: {}]
  %s1 = inlined_call_operand.hbm [shape: f32[64,128], index: 1, kind: input, shape index: {}]
  %s2 = inlined_call_operand.hbm [shape: f32[8,128], index: 2, kind: input, shape index: {}]
  %s3 = inlined_call_operand.hbm [shape: f32[2,8,128], index: 3, kind: output, shape index: {}]
  %s4 = sld [smem:[#allocation0]]
  $region73: #{tpu_custom_call.1} parent=0
    _
  %s6 = ssub.s32 1, %s4
  %s7 = scalar_select 0, %s6, %s4
  %s9 = sshll.u32 %s0, 4
  %s10 = int_to_ptr.hbm [resolvable:$true] %s9
  %12 = dma.hbm_to_smem %s10, 16, [#allocation5], [#allocation4]
  %14 = dma.done [#allocation4], 16
  %15 = sfence
  $region1: #{tpu_custom_call.1} parent=0
    #allocation6 [shape = 'u8[4096]{0}', space=vmem, size = 0x1000, scoped, tag = 'input window, operand 2, single buffered']
    #allocation7 [shape = 's32[2]{0}', space=sflag, size = 0x8, scoped, tag = 'scoped memory for tpu_custom_call.1']
    #allocation8 [shape = 's32[2]{0}', space=sflag, size = 0x8, scoped, tag = 'scoped memory for tpu_custom_call.1']
    #allocation9 [shape = 'u8[8192]{0}', space=vmem, size = 0x2000, scoped, tag = 'output window, operand 0']
    %16 = vsyncpa [#allocation7], 0
    %17 = vsyncpa [#allocation8], 0
    %s18 = scalar_lea.sflag [#allocation8], 1
    %19 = vsyncpa %s18, 0
    loop: start=0, step=1, limit=4
    $region2: #{tpu_custom_call.1} parent=1 // loop_pre_header
      _
    $region3: #{tpu_custom_call.1} parent=1 // loop_header
      %s21 = sphi 0, %s25
      %p22 = scmp.ge.s32.totalorder %s21, 4
      %s28 = sphi 0, %s40
      %s29 = sphi 0, %s36
      %s30 = sphi 0, %s28
      %s31 = sphi 0, %s29
      %s32 = sphi 0, %s30
      %s33 = sphi 0, %s31
      %s43 = sphi 0, %s45
      %s46 = sphi 0, %s43
      %s47 = sphi 0, %s46
      %s63 = sphi 0, %s47
      %s71 = sphi 0, %s73
      %s74 = sphi 0, %s71
      %s75 = sphi 0, %s74
      %s91 = sphi 0, %s75
    $region4: #{tpu_custom_call.1} parent=1 // loop_header_branch
      %24 = sbr.rel (%p22) target = $region8
    $region5: #{tpu_custom_call.1} parent=1 // loop_body
      %s26 = ssub.s32 %s21, 1
      %s27 = ssub.s32 %s21, 2
      %s34 = sadd.s32 1, %s29
      %p35 = scmp.ge.s32.totalorder %s34, 1
      %s36 = scalar_select %p35, 0, %s34
      %s37 = sadd.s32 1, %s28
      %s38 = scalar_select %p35, %s37, %s28
      %p39 = scmp.ge.s32.totalorder %s38, 2
      %s40 = scalar_select %p39, 0, %s38
      %s41 = ssub.s32 %s29, %s36
      %p42 = scmp.eq.s32.totalorder %s41, 0
      %s44 = sadd.s32 %s43, 1
      %s45 = scalar_select %p42, %s43, %s44
      %p48 = pneg %p42
      %p49 = scmp.eq.s32.totalorder %s21, 1
      %p50 = por %p48, %p49
      %p51 = scmp.ne.s32.totalorder %s43, %s46
      %p52 = scmp.eq.s32.totalorder %s21, 0
      %p53 = por %p51, %p52
      %p54 = scmp.ne.s32.totalorder %s43, %s46
      %p55 = scmp.eq.s32.totalorder %s26, 1
      %p56 = por %p54, %p55
      %p57 = scmp.ne.s32.totalorder %s46, %s47
      %p58 = scmp.eq.s32.totalorder %s26, 0
      %p59 = por %p57, %p58
      %p60 = scmp.ne.s32.totalorder %s46, %s47
      %p61 = scmp.eq.s32.totalorder %s27, 1
      %p62 = por %p60, %p61
      %p64 = scmp.ne.s32.totalorder %s47, %s63
      %p65 = scmp.eq.s32.totalorder %s27, 0
      %p66 = por %p64, %p65
      %s67 = ssub.s32 %s28, %s40
      %s68 = ssub.s32 %s29, %s36
      %s69 = sor.u32 %s67, %s68
      %p70 = scmp.eq.s32.totalorder %s69, 0
      %s72 = sadd.s32 %s71, 1
      %s73 = scalar_select %p70, %s71, %s72
      %p76 = pneg %p70
      %p77 = scmp.eq.s32.totalorder %s21, 1
      %p78 = por %p76, %p77
      %p79 = scmp.ne.s32.totalorder %s71, %s74
      %p80 = scmp.eq.s32.totalorder %s21, 0
      %p81 = por %p79, %p80
      %p82 = scmp.ne.s32.totalorder %s71, %s74
      %p83 = scmp.eq.s32.totalorder %s26, 1
      %p84 = por %p82, %p83
      %p85 = scmp.ne.s32.totalorder %s74, %s75
      %p86 = scmp.eq.s32.totalorder %s26, 0
      %p87 = por %p85, %p86
      %p88 = scmp.ne.s32.totalorder %s74, %s75
      %p89 = scmp.eq.s32.totalorder %s27, 1
      %p90 = por %p88, %p89
      %p92 = scmp.ne.s32.totalorder %s75, %s91
      %p93 = scmp.eq.s32.totalorder %s27, 0
      %p94 = por %p92, %p93
      %p95 = scmp.le.s32.totalorder 1, %s21
      %p96 = scmp.lt.s32.totalorder %s21, 3
      %p97 = pnand %p95, %p96
      %p98 = pneg %p97
      // Predicated region
      $region9: #{tpu_custom_call.1} parent=5 // pred_check
        _
      $region10: #{tpu_custom_call.1} parent=5 // pred_check_branch
        %100 = sbr.rel (%p97) target = $region12
      $region11: #{tpu_custom_call.1} parent=5 // pred_region
        %s101 = ssub.s32 %s21, 1
        // Predicated region
        $region13: #{tpu_custom_call.1} parent=11 // pred_check
          %p102 = pneg %p59
        $region14: #{tpu_custom_call.1} parent=11 // pred_check_branch
          %104 = sbr.rel (%p102) target = $region16
        $region15: #{tpu_custom_call.1} parent=11 // pred_region
          %106 = vsyncadd [#allocation7], 0
          %s107 = smul.addr %s31, 8
          %s108 = scalar_lea.hbm %s2, %s107
          %s110 = sshll.u32 %s108, 4
          %s111 = int_to_ptr.hbm [resolvable:$true] %s110
          %s112 = sshll.u32 [#allocation6], 4
          %s113 = int_to_ptr.vmem [resolvable:$true] %s112
          %115 = dma.hbm_to_vmem [thread:$0]  %s111, 128, %s113, [#allocation7]
        $region16: #{tpu_custom_call.1} parent=11 // pred_fallthru
          _
      $region12: #{tpu_custom_call.1} parent=5 // pred_fallthru
        _
      %p116 = scmp.lt.s32.totalorder %s21, 2
      // Predicated region
      $region17: #{tpu_custom_call.1} parent=5 // pred_check
        %p117 = pneg %p116
      $region18: #{tpu_custom_call.1} parent=5 // pred_check_branch
        %119 = sbr.rel (%p117) target = $region20
      $region19: #{tpu_custom_call.1} parent=5 // pred_region
        _
      $region20: #{tpu_custom_call.1} parent=5 // pred_fallthru
        _
      %p120 = scmp.le.s32.totalorder 1, %s21
      %p121 = scmp.lt.s32.totalorder %s21, 3
      %p122 = pnand %p120, %p121
      %p123 = pneg %p122
      // Predicated region
      $region21: #{tpu_custom_call.1} parent=5 // pred_check
        _
      $region22: #{tpu_custom_call.1} parent=5 // pred_check_branch
        %125 = sbr.rel (%p122) target = $region24
      $region23: #{tpu_custom_call.1} parent=5 // pred_region
        %s126 = ssub.s32 %s21, 1
        // Predicated region
        $region25: #{tpu_custom_call.1} parent=23 // pred_check
          %p127 = pneg %p59
        $region26: #{tpu_custom_call.1} parent=23 // pred_check_branch
          %129 = sbr.rel (%p127) target = $region28
        $region27: #{tpu_custom_call.1} parent=23 // pred_region
          %131 = dma.done [#allocation7], 128
        $region28: #{tpu_custom_call.1} parent=23 // pred_fallthru
          _
        %p132 = pneg %p59
        %p133 = pneg %p56
        %p134 = pneg %p87
        %p135 = pneg %p84
        %s136 = sand.u32 %s74, 1
        %s137 = scalar_lea.sflag [#allocation8], %s136
        %s138 = sand.u32 %s74, 1
        %s139 = smul.addr %s138, 8
        %s140 = scalar_lea.vmem [#allocation9], %s139
        %s141 = smul.u32 %s31, 8
        %s142 = smul.u32 %s30, 8
        %s143 = sadd.s32 %s142, %s141
        %s144 = sadd.s32 %s143, 7
        %p145 = scmp.lt.s32.totalorder %s143, %s144
        %s146 = scalar_select %p145, %s143, %s144
        %s147 = sld [smem:[#allocation5 + %s146]]
        %p148 = scmp.gt.s32.totalorder %s147, 0
        %s149 = scalar_select %p148, %s147, 0
        %p150 = scmp.lt.s32.totalorder %s149, 63
        %s151 = scalar_select %p150, %s149, 63
        %s152 = scalar_lea.hbm %s1, %s151
        // Predicated region
        $region29: #{tpu_custom_call.1} parent=23 // pred_check
          _
        $region30: #{tpu_custom_call.1} parent=23 // pred_check_branch
          %154 = sbr.rel target = $region32
        $region31: #{tpu_custom_call.1} parent=23 // pred_region
          %155 = sst [smem:[#allocation12]] [#allocation11]
          %156 = sst [smem:[#allocation13]] [#allocation10]
        $region32: #{tpu_custom_call.1} parent=23 // pred_fallthru
          _
        %158 = shalt.err (0)
        %s160 = sshll.u32 %s152, 4
        %s161 = int_to_ptr.hbm [resolvable:$true] %s160
        %s162 = sshll.u32 [#allocation2], 4
        %s163 = int_to_ptr.vmem [resolvable:$true] %s162
        %165 = dma.hbm_to_vmem [thread:$0]  %s161, 16, %s163, [#allocation3]
        %s166 = sadd.s32 %s143, 1
        %p167 = scmp.lt.s32.totalorder %s166, %s144
        %s168 = scalar_select %p167, %s166, %s144
        %s169 = sld [smem:[#allocation5 + %s168]]
        %p170 = scmp.gt.s32.totalorder %s169, 0
        %s171 = scalar_select %p170, %s169, 0
        %p172 = scmp.lt.s32.totalorder %s171, 63
        %s173 = scalar_select %p172, %s171, 63
        %s174 = scalar_lea.hbm %s1, %s173
        %s175 = scalar_lea.vmem [#allocation2], 1
        %s176 = scalar_lea.sflag [#allocation3], 1
        // Predicated region
        $region33: #{tpu_custom_call.1} parent=23 // pred_check
          _
        $region34: #{tpu_custom_call.1} parent=23 // pred_check_branch
          %178 = sbr.rel target = $region36
        $region35: #{tpu_custom_call.1} parent=23 // pred_region
          %179 = sst [smem:[#allocation12]] [#allocation15]
          %180 = sst [smem:[#allocation13]] [#allocation14]
        $region36: #{tpu_custom_call.1} parent=23 // pred_fallthru
          _
        %182 = shalt.err (0)
        %s184 = sshll.u32 %s174, 4
        %s185 = int_to_ptr.hbm [resolvable:$true] %s184
        %s186 = sshll.u32 %s175, 4
        %s187 = int_to_ptr.vmem [resolvable:$true] %s186
        %189 = dma.hbm_to_vmem [thread:$0]  %s185, 16, %s187, %s176
        %s190 = sadd.s32 %s143, 2
        %p191 = scmp.lt.s32.totalorder %s190, %s144
        %s192 = scalar_select %p191, %s190, %s144
        %s193 = sld [smem:[#allocation5 + %s192]]
        %p194 = scmp.gt.s32.totalorder %s193, 0
        %s195 = scalar_select %p194, %s193, 0
        %p196 = scmp.lt.s32.totalorder %s195, 63
        %s197 = scalar_select %p196, %s195, 63
        %s198 = scalar_lea.hbm %s1, %s197
        %s199 = scalar_lea.vmem [#allocation2], 2
        %s200 = scalar_lea.sflag [#allocation3], 2
        // Predicated region
        $region37: #{tpu_custom_call.1} parent=23 // pred_check
          _
        $region38: #{tpu_custom_call.1} parent=23 // pred_check_branch
          %202 = sbr.rel target = $region40
        $region39: #{tpu_custom_call.1} parent=23 // pred_region
          %203 = sst [smem:[#allocation12]] [#allocation17]
          %204 = sst [smem:[#allocation13]] [#allocation16]
        $region40: #{tpu_custom_call.1} parent=23 // pred_fallthru
          _
        %206 = shalt.err (0)
        %s208 = sshll.u32 %s198, 4
        %s209 = int_to_ptr.hbm [resolvable:$true] %s208
        %s210 = sshll.u32 %s199, 4
        %s211 = int_to_ptr.vmem [resolvable:$true] %s210
        %213 = dma.hbm_to_vmem [thread:$0]  %s209, 16, %s211, %s200
        %s214 = sadd.s32 %s143, 3
        %p215 = scmp.lt.s32.totalorder %s214, %s144
        %s216 = scalar_select %p215, %s214, %s144
        %s217 = sld [smem:[#allocation5 + %s216]]
        %p218 = scmp.gt.s32.totalorder %s217, 0
        %s219 = scalar_select %p218, %s217, 0
        %p220 = scmp.lt.s32.totalorder %s219, 63
        %s221 = scalar_select %p220, %s219, 63
        %s222 = scalar_lea.hbm %s1, %s221
        %s223 = scalar_lea.vmem [#allocation2], 3
        %s224 = scalar_lea.sflag [#allocation3], 3
        // Predicated region
        $region41: #{tpu_custom_call.1} parent=23 // pred_check
          _
        $region42: #{tpu_custom_call.1} parent=23 // pred_check_branch
          %226 = sbr.rel target = $region44
        $region43: #{tpu_custom_call.1} parent=23 // pred_region
          %227 = sst [smem:[#allocation12]] [#allocation19]
          %228 = sst [smem:[#allocation13]] [#allocation18]
        $region44: #{tpu_custom_call.1} parent=23 // pred_fallthru
          _
        %230 = shalt.err (0)
        %s232 = sshll.u32 %s222, 4
        %s233 = int_to_ptr.hbm [resolvable:$true] %s232
        %s234 = sshll.u32 %s223, 4
        %s235 = int_to_ptr.vmem [resolvable:$true] %s234
        %237 = dma.hbm_to_vmem [thread:$0]  %s233, 16, %s235, %s224
        %s238 = sadd.s32 %s143, 4
        %p239 = scmp.lt.s32.totalorder %s238, %s144
        %s240 = scalar_select %p239, %s238, %s144
        %s241 = sld [smem:[#allocation5 + %s240]]
        %p242 = scmp.gt.s32.totalorder %s241, 0
        %s243 = scalar_select %p242, %s241, 0
        %p244 = scmp.lt.s32.totalorder %s243, 63
        %s245 = scalar_select %p244, %s243, 63
        %s246 = scalar_lea.hbm %s1, %s245
        %s247 = scalar_lea.vmem [#allocation2], 4
        %s248 = scalar_lea.sflag [#allocation3], 4
        // Predicated region
        $region45: #{tpu_custom_call.1} parent=23 // pred_check
          _
        $region46: #{tpu_custom_call.1} parent=23 // pred_check_branch
          %250 = sbr.rel target = $region48
        $region47: #{tpu_custom_call.1} parent=23 // pred_region
          %251 = sst [smem:[#allocation12]] [#allocation21]
          %252 = sst [smem:[#allocation13]] [#allocation20]
        $region48: #{tpu_custom_call.1} parent=23 // pred_fallthru
          _
        %254 = shalt.err (0)
        %s256 = sshll.u32 %s246, 4
        %s257 = int_to_ptr.hbm [resolvable:$true] %s256
        %s258 = sshll.u32 %s247, 4
        %s259 = int_to_ptr.vmem [resolvable:$true] %s258
        %261 = dma.hbm_to_vmem [thread:$0]  %s257, 16, %s259, %s248
        %s262 = sadd.s32 %s143, 5
        %p263 = scmp.lt.s32.totalorder %s262, %s144
        %s264 = scalar_select %p263, %s262, %s144
        %s265 = sld [smem:[#allocation5 + %s264]]
        %p266 = scmp.gt.s32.totalorder %s265, 0
        %s267 = scalar_select %p266, %s265, 0
        %p268 = scmp.lt.s32.totalorder %s267, 63
        %s269 = scalar_select %p268, %s267, 63
        %s270 = scalar_lea.hbm %s1, %s269
        %s271 = scalar_lea.vmem [#allocation2], 5
        %s272 = scalar_lea.sflag [#allocation3], 5
        // Predicated region
        $region49: #{tpu_custom_call.1} parent=23 // pred_check
          _
        $region50: #{tpu_custom_call.1} parent=23 // pred_check_branch
          %274 = sbr.rel target = $region52
        $region51: #{tpu_custom_call.1} parent=23 // pred_region
          %275 = sst [smem:[#allocation12]] [#allocation23]
          %276 = sst [smem:[#allocation13]] [#allocation22]
        $region52: #{tpu_custom_call.1} parent=23 // pred_fallthru
          _
        %278 = shalt.err (0)
        %s280 = sshll.u32 %s270, 4
        %s281 = int_to_ptr.hbm [resolvable:$true] %s280
        %s282 = sshll.u32 %s271, 4
        %s283 = int_to_ptr.vmem [resolvable:$true] %s282
        %285 = dma.hbm_to_vmem [thread:$0]  %s281, 16, %s283, %s272
        %s286 = sadd.s32 %s143, 6
        %p287 = scmp.lt.s32.totalorder %s286, %s144
        %s288 = scalar_select %p287, %s286, %s144
        %s289 = sld [smem:[#allocation5 + %s288]]
        %p290 = scmp.gt.s32.totalorder %s289, 0
        %s291 = scalar_select %p290, %s289, 0
        %p292 = scmp.lt.s32.totalorder %s291, 63
        %s293 = scalar_select %p292, %s291, 63
        %s294 = scalar_lea.hbm %s1, %s293
        %s295 = scalar_lea.vmem [#allocation2], 6
        %s296 = scalar_lea.sflag [#allocation3], 6
        // Predicated region
        $region53: #{tpu_custom_call.1} parent=23 // pred_check
          _
        $region54: #{tpu_custom_call.1} parent=23 // pred_check_branch
          %298 = sbr.rel target = $region56
        $region55: #{tpu_custom_call.1} parent=23 // pred_region
          %299 = sst [smem:[#allocation12]] [#allocation25]
          %300 = sst [smem:[#allocation13]] [#allocation24]
        $region56: #{tpu_custom_call.1} parent=23 // pred_fallthru
          _
        %302 = shalt.err (0)
        %s304 = sshll.u32 %s294, 4
        %s305 = int_to_ptr.hbm [resolvable:$true] %s304
        %s306 = sshll.u32 %s295, 4
        %s307 = int_to_ptr.vmem [resolvable:$true] %s306
        %309 = dma.hbm_to_vmem [thread:$0]  %s305, 16, %s307, %s296
        %s310 = sld [smem:[#allocation5 + %s144]]
        %p311 = scmp.gt.s32.totalorder %s310, 0
        %s312 = scalar_select %p311, %s310, 0
        %p313 = scmp.lt.s32.totalorder %s312, 63
        %s314 = scalar_select %p313, %s312, 63
        %s315 = scalar_lea.hbm %s1, %s314
        %s316 = scalar_lea.vmem [#allocation2], 7
        %s317 = scalar_lea.sflag [#allocation3], 7
        // Predicated region
        $region57: #{tpu_custom_call.1} parent=23 // pred_check
          _
        $region58: #{tpu_custom_call.1} parent=23 // pred_check_branch
          %319 = sbr.rel target = $region60
        $region59: #{tpu_custom_call.1} parent=23 // pred_region
          %320 = sst [smem:[#allocation12]] [#allocation27]
          %321 = sst [smem:[#allocation13]] [#allocation26]
        $region60: #{tpu_custom_call.1} parent=23 // pred_fallthru
          _
        %323 = shalt.err (0)
        %s325 = sshll.u32 %s315, 4
        %s326 = int_to_ptr.hbm [resolvable:$true] %s325
        %s327 = sshll.u32 %s316, 4
        %s328 = int_to_ptr.vmem [resolvable:$true] %s327
        %330 = dma.hbm_to_vmem [thread:$0]  %s326, 16, %s328, %s317
        %s331 = sand.u32 0, 31
        %s332 = scalar_lea.sflag [#allocation3], %s331
        %s333 = smul.u32 1, 1
        %s334 = sshll.u32 %s333, 4
        %335 = dma.done %s332, %s334
        %s336 = sadd.s32 0, 1
        %s337 = sand.u32 %s336, 31
        %s338 = scalar_lea.sflag [#allocation3], %s337
        %s339 = sshll.u32 %s333, 4
        %340 = dma.done %s338, %s339
        %s341 = sadd.s32 0, 2
        %s342 = sand.u32 %s341, 31
        %s343 = scalar_lea.sflag [#allocation3], %s342
        %s344 = sshll.u32 %s333, 4
        %345 = dma.done %s343, %s344
        %s346 = sadd.s32 0, 3
        %s347 = sand.u32 %s346, 31
        %s348 = scalar_lea.sflag [#allocation3], %s347
        %s349 = sshll.u32 %s333, 4
        %350 = dma.done %s348, %s349
        %s351 = sadd.s32 0, 4
        %s352 = sand.u32 %s351, 31
        %s353 = scalar_lea.sflag [#allocation3], %s352
        %s354 = sshll.u32 %s333, 4
        %355 = dma.done %s353, %s354
        %s356 = sadd.s32 0, 5
        %s357 = sand.u32 %s356, 31
        %s358 = scalar_lea.sflag [#allocation3], %s357
        %s359 = sshll.u32 %s333, 4
        %360 = dma.done %s358, %s359
        %s361 = sadd.s32 0, 6
        %s362 = sand.u32 %s361, 31
        %s363 = scalar_lea.sflag [#allocation3], %s362
        %s364 = sshll.u32 %s333, 4
        %365 = dma.done %s363, %s364
        %s366 = sadd.s32 0, 7
        %s367 = sand.u32 %s366, 31
        %s368 = scalar_lea.sflag [#allocation3], %s367
        %s369 = sshll.u32 %s333, 4
        %370 = dma.done %s368, %s369
        %v371 = vld [vmem:[#allocation2] sm:$0xff]
        %v372 = vld [vmem:[#allocation6] sm:$0xff]
        %v373 = vadd.f32 %v371, %v372
        %374 = vst [vmem:[%s140] sm:$0xff] %v373
        %s375 = sand.u32 %s74, 1
        %s376 = scalar_lea.sflag [#allocation8], %s375
        %s377 = sand.u32 %s74, 1
        %s378 = smul.addr %s377, 8
        %s379 = scalar_lea.vmem [#allocation9], %s378
        // Predicated region
        $region61: #{tpu_custom_call.1} parent=23 // pred_check
          %p380 = pneg %p84
        $region62: #{tpu_custom_call.1} parent=23 // pred_check_branch
          %382 = sbr.rel (%p380) target = $region64
        $region63: #{tpu_custom_call.1} parent=23 // pred_region
          %384 = vsyncadd %s376, 0
          %s385 = sadd.s32 %s31, %s30
          %s386 = smul.addr %s385, 8
          %s387 = scalar_lea.hbm %s3, %s386
          %s389 = sshll.u32 %s379, 4
          %s390 = int_to_ptr.vmem [resolvable:$true] %s389
          %s391 = sshll.u32 %s387, 4
          %s392 = int_to_ptr.hbm [resolvable:$true] %s391
          %394 = dma.vmem_to_hbm [thread:$0]  %s390, 128, %s392, %s376
        $region64: #{tpu_custom_call.1} parent=23 // pred_fallthru
          _
      $region24: #{tpu_custom_call.1} parent=5 // pred_fallthru
        _
      %p395 = scmp.le.s32.totalorder 2, %s21
      // Predicated region
      $region65: #{tpu_custom_call.1} parent=5 // pred_check
        %p396 = pneg %p395
      $region66: #{tpu_custom_call.1} parent=5 // pred_check_branch
        %398 = sbr.rel (%p396) target = $region68
      $region67: #{tpu_custom_call.1} parent=5 // pred_region
        %s399 = ssub.s32 %s21, 2
        // Predicated region
        $region69: #{tpu_custom_call.1} parent=67 // pred_check
          %p400 = pneg %p90
        $region70: #{tpu_custom_call.1} parent=67 // pred_check_branch
          %402 = sbr.rel (%p400) target = $region72
        $region71: #{tpu_custom_call.1} parent=67 // pred_region
          %s403 = sand.u32 %s75, 1
          %s404 = scalar_lea.sflag [#allocation8], %s403
          %s405 = sand.u32 %s75, 1
          %s406 = smul.addr %s405, 8
          %s407 = scalar_lea.vmem [#allocation9], %s406
          %409 = dma.done %s404, 128
        $region72: #{tpu_custom_call.1} parent=67 // pred_fallthru
          _
      $region68: #{tpu_custom_call.1} parent=5 // pred_fallthru
        _
    $region6: #{tpu_custom_call.1} parent=1 // loop_footer
      %s25 = sadd.s32 1, %s21
    $region7: #{tpu_custom_call.1} parent=1 // loop_footer_branch
      %20 = sbr.rel target = $region3
    $region8: #{tpu_custom_call.1} parent=1 // loop_exit
      _
    %410 = vsyncpa [#allocation7], 1
    %s411 = scalar_lea.sflag [#allocation7], 1
    %412 = vsyncpa %s411, 1
    %413 = vsyncpa [#allocation8], 1
    %s414 = scalar_lea.sflag [#allocation8], 1
    %415 = vsyncpa %s414, 1
  %416 = vsyncmov [#allocation3]
  %s417 = vpop.sfrf %416
  %p418 = scmp.eq.s32.totalorder %s417, 0
  %p419 = pneg %p418
  %421 = shalt.err (%p419)
  %s422 = scalar_lea.sflag [#allocation3], 1
  %423 = vsyncmov %s422
  %s424 = vpop.sfrf %423
  %p425 = scmp.eq.s32.totalorder %s424, 0
  %p426 = pneg %p425
  %428 = shalt.err (%p426)
  %s429 = scalar_lea.sflag [#allocation3], 2
  %430 = vsyncmov %s429
  %s431 = vpop.sfrf %430
  %p432 = scmp.eq.s32.totalorder %s431, 0
  %p433 = pneg %p432
  %435 = shalt.err (%p433)
  %s436 = scalar_lea.sflag [#allocation3], 3
  %437 = vsyncmov %s436
  %s438 = vpop.sfrf %437
  %p439 = scmp.eq.s32.totalorder %s438, 0
  %p440 = pneg %p439
  %442 = shalt.err (%p440)
  %s443 = scalar_lea.sflag [#allocation3], 4
  %444 = vsyncmov %s443
  %s445 = vpop.sfrf %444
  %p446 = scmp.eq.s32.totalorder %s445, 0
  %p447 = pneg %p446
  %449 = shalt.err (%p447)
  %s450 = scalar_lea.sflag [#allocation3], 5
  %451 = vsyncmov %s450
  %s452 = vpop.sfrf %451
  %p453 = scmp.eq.s32.totalorder %s452, 0
  %p454 = pneg %p453
  %456 = shalt.err (%p454)
  %s457 = scalar_lea.sflag [#allocation3], 6
  %458 = vsyncmov %s457
  %s459 = vpop.sfrf %458
  %p460 = scmp.eq.s32.totalorder %s459, 0
  %p461 = pneg %p460
  %463 = shalt.err (%p461)
  %s464 = scalar_lea.sflag [#allocation3], 7
  %465 = vsyncmov %s464
  %s466 = vpop.sfrf %465
  %p467 = scmp.eq.s32.totalorder %s466, 0
  %p468 = pneg %p467
  %470 = shalt.err (%p468)
  %s471 = scalar_lea.sflag [#allocation3], 8
  %472 = vsyncmov %s471
  %s473 = vpop.sfrf %472
  %p474 = scmp.eq.s32.totalorder %s473, 0
  %p475 = pneg %p474
  %477 = shalt.err (%p475)
  %s478 = scalar_lea.sflag [#allocation3], 9
  %479 = vsyncmov %s478
  %s480 = vpop.sfrf %479
  %p481 = scmp.eq.s32.totalorder %s480, 0
  %p482 = pneg %p481
  %484 = shalt.err (%p482)
  %s485 = scalar_lea.sflag [#allocation3], 10
  %486 = vsyncmov %s485
  %s487 = vpop.sfrf %486
  %p488 = scmp.eq.s32.totalorder %s487, 0
  %p489 = pneg %p488
  %491 = shalt.err (%p489)
  %s492 = scalar_lea.sflag [#allocation3], 11
  %493 = vsyncmov %s492
  %s494 = vpop.sfrf %493
  %p495 = scmp.eq.s32.totalorder %s494, 0
  %p496 = pneg %p495
  %498 = shalt.err (%p496)
  %s499 = scalar_lea.sflag [#allocation3], 12
  %500 = vsyncmov %s499
  %s501 = vpop.sfrf %500
  %p502 = scmp.eq.s32.totalorder %s501, 0
  %p503 = pneg %p502
  %505 = shalt.err (%p503)
  %s506 = scalar_lea.sflag [#allocation3], 13
  %507 = vsyncmov %s506
  %s508 = vpop.sfrf %507
  %p509 = scmp.eq.s32.totalorder %s508, 0
  %p510 = pneg %p509
  %512 = shalt.err (%p510)
  %s513 = scalar_lea.sflag [#allocation3], 14
  %514 = vsyncmov %s513
  %s515 = vpop.sfrf %514
  %p516 = scmp.eq.s32.totalorder %s515, 0
  %p517 = pneg %p516
  %519 = shalt.err (%p517)
  %s520 = scalar_lea.sflag [#allocation3], 15
  %521 = vsyncmov %s520
  %s522 = vpop.sfrf %521
  %p523 = scmp.eq.s32.totalorder %s522, 0
  %p524 = pneg %p523
  %526 = shalt.err (%p524)
  %s527 = scalar_lea.sflag [#allocation3], 16
  %528 = vsyncmov %s527
  %s529 = vpop.sfrf %528
  %p530 = scmp.eq.s32.totalorder %s529, 0
  %p531 = pneg %p530
  %533 = shalt.err (%p531)
  %s534 = scalar_lea.sflag [#allocation3], 17
  %535 = vsyncmov %s534
  %s536 = vpop.sfrf %535
  %p537 = scmp.eq.s32.totalorder %s536, 0
  %p538 = pneg %p537
  %540 = shalt.err (%p538)
  %s541 = scalar_lea.sflag [#allocation3], 18
  %542 = vsyncmov %s541
  %s543 = vpop.sfrf %542
  %p544 = scmp.eq.s32.totalorder %s543, 0
  %p545 = pneg %p544
  %547 = shalt.err (%p545)
  %s548 = scalar_lea.sflag [#allocation3], 19
  %549 = vsyncmov %s548
  %s550 = vpop.sfrf %549
  %p551 = scmp.eq.s32.totalorder %s550, 0
  %p552 = pneg %p551
  %554 = shalt.err (%p552)
  %s555 = scalar_lea.sflag [#allocation3], 20
  %556 = vsyncmov %s555
  %s557 = vpop.sfrf %556
  %p558 = scmp.eq.s32.totalorder %s557, 0
  %p559 = pneg %p558
  %561 = shalt.err (%p559)
  %s562 = scalar_lea.sflag [#allocation3], 21
  %563 = vsyncmov %s562
  %s564 = vpop.sfrf %563
  %p565 = scmp.eq.s32.totalorder %s564, 0
  %p566 = pneg %p565
  %568 = shalt.err (%p566)
  %s569 = scalar_lea.sflag [#allocation3], 22
  %570 = vsyncmov %s569
  %s571 = vpop.sfrf %570
  %p572 = scmp.eq.s32.totalorder %s571, 0
  %p573 = pneg %p572
  %575 = shalt.err (%p573)
  %s576 = scalar_lea.sflag [#allocation3], 23
  %577 = vsyncmov %s576
  %s578 = vpop.sfrf %577
  %p579 = scmp.eq.s32.totalorder %s578, 0
  %p580 = pneg %p579
  %582 = shalt.err (%p580)
  %s583 = scalar_lea.sflag [#allocation3], 24
  %584 = vsyncmov %s583
  %s585 = vpop.sfrf %584
  %p586 = scmp.eq.s32.totalorder %s585, 0
  %p587 = pneg %p586
  %589 = shalt.err (%p587)
  %s590 = scalar_lea.sflag [#allocation3], 25
  %591 = vsyncmov %s590
  %s592 = vpop.sfrf %591
  %p593 = scmp.eq.s32.totalorder %s592, 0
  %p594 = pneg %p593
  %596 = shalt.err (%p594)
  %s597 = scalar_lea.sflag [#allocation3], 26
  %598 = vsyncmov %s597
  %s599 = vpop.sfrf %598
  %p600 = scmp.eq.s32.totalorder %s599, 0
  %p601 = pneg %p600
  %603 = shalt.err (%p601)
  %s604 = scalar_lea.sflag [#allocation3], 27
  %605 = vsyncmov %s604
  %s606 = vpop.sfrf %605
  %p607 = scmp.eq.s32.totalorder %s606, 0
  %p608 = pneg %p607
  %610 = shalt.err (%p608)
  %s611 = scalar_lea.sflag [#allocation3], 28
  %612 = vsyncmov %s611
  %s613 = vpop.sfrf %612
  %p614 = scmp.eq.s32.totalorder %s613, 0
  %p615 = pneg %p614
  %617 = shalt.err (%p615)
  %s618 = scalar_lea.sflag [#allocation3], 29
  %619 = vsyncmov %s618
  %s620 = vpop.sfrf %619
  %p621 = scmp.eq.s32.totalorder %s620, 0
  %p622 = pneg %p621
  %624 = shalt.err (%p622)
  %s625 = scalar_lea.sflag [#allocation3], 30
  %626 = vsyncmov %s625
  %s627 = vpop.sfrf %626
  %p628 = scmp.eq.s32.totalorder %s627, 0
  %p629 = pneg %p628
  %631 = shalt.err (%p629)
  %s632 = scalar_lea.sflag [#allocation3], 31
  %633 = vsyncmov %s632
  %s634 = vpop.sfrf %633
  %p635 = scmp.eq.s32.totalorder %s634, 0
  %p636 = pneg %p635
  %638 = shalt.err (%p636)

</llo_original>
